<compile_context>
chip_gen: v6e
topology: v6e:2x2x1
jax: 0.10.0
libtpu: 0.0.40
codegen_flags: <defaults>
</compile_context>

<pallas_src>
from functools import partial

import jax
import jax.numpy as jnp
from jax.experimental import pallas as pl
from jax.experimental.pallas import tpu as pltpu


def cross_attention_kernel(x_ref, y_ref, m_ref, xm_ref,
                           wq_ref, wk_ref, wv_ref, gamma_ref, beta_ref,
                           o_ref, *, num_head, head_dim, inv_temp, eps):
    # Per-grid-step blocks:
    #   x_ref  : (B, n_t, n_f) f32      y_ref  : (B, n_a, n_f) f32
    #   m_ref  : (B, n_t, n_a) int8     xm_ref : (B, n_t, 1)   f32
    #   wq/wk/wv_ref : (n_f, n_f) bf16  (pre-transposed: in_features x out_features)
    #   gamma/beta   : (1, n_f) f32
    nh, d = num_head, head_dim
    nb, n_t, n_f = x_ref.shape
    n_a = y_ref.shape[1]

    # ---- Full-width projections: M = B*n_t (or B*n_a) rows, lane dim = n_f ----
    x = x_ref[...].reshape(nb * n_t, n_f)          # f32, reused for residual/LN
    y = y_ref[...].reshape(nb * n_a, n_f)

    x_lp = x.astype(jnp.bfloat16)
    y_lp = y.astype(jnp.bfloat16)

    q = jnp.dot(x_lp, wq_ref[...], preferred_element_type=jnp.float32)  # (B*n_t, n_f)
    k = jnp.dot(y_lp, wk_ref[...], preferred_element_type=jnp.float32)  # (B*n_a, n_f)
    v = jnp.dot(y_lp, wv_ref[...], preferred_element_type=jnp.float32)  # (B*n_a, n_f)

    # 1/temperature applied in f32 (equivalent to (q @ k_t) / tp).
    q = q * inv_temp

    q_lp = q.astype(jnp.bfloat16)
    k_lp = k.astype(jnp.bfloat16)
    v_lp = v.astype(jnp.bfloat16)

    # ---- Head split: static lane slices + leading-dim stack (only relayout) ----
    # Feature index f = h*d + i, matching torch's .view(n_b, n, nh, d).
    def split_heads(t, rows):                      # (B*rows, n_f) -> (nh*B, rows, d)
        parts = [t[:, h * d:(h + 1) * d].reshape(1, nb, rows, d) for h in range(nh)]
        return jnp.concatenate(parts, axis=0).reshape(nh * nb, rows, d)

    q_h = split_heads(q_lp, n_t)                   # (nh*B, n_t, d)
    k_h = split_heads(k_lp, n_a)                   # (nh*B, n_a, d)
    v_h = split_heads(v_lp, n_a)                   # (nh*B, n_a, d)

    # ---- Scores for every (head, batch) pair in one batched contraction ----
    s = jnp.einsum('gtd,gad->gta', q_h, k_h,
                   preferred_element_type=jnp.float32)        # (nh*B, n_t, n_a)

    # Additive mask built in-kernel from the int8 mask (0 visible / 1 masked).
    # TODO(synk): fully-masked rows yield uniform weights (mean of V) instead of
    # PyTorch's masked_fill(-inf) NaN behaviour.
    mbias = m_ref[...].astype(jnp.float32) * (-1e30)          # (B, n_t, n_a)
    s = (s.reshape(nh, nb, n_t, n_a) + mbias[None]).reshape(nh * nb, n_t, n_a)

    # ---- Numerically stable softmax over the attended axis (f32, exact div) ----
    s_max = jnp.max(s, axis=-1, keepdims=True)
    p = jnp.exp(s - s_max)
    p = p / jnp.sum(p, axis=-1, keepdims=True)

    # ---- PV, then head merge with a single last-dim concat ----
    o = jnp.einsum('gta,gad->gtd', p.astype(jnp.bfloat16), v_h,
                   preferred_element_type=jnp.float32)        # (nh*B, n_t, d)
    o4 = o.reshape(nh, nb, n_t, d)
    attn = jnp.concatenate([o4[h] for h in range(nh)], axis=-1)   # (B, n_t, n_f)
    attn = attn.reshape(nb * n_t, n_f)

    # ---- Residual + LayerNorm (all f32) + x_mask gate ----
    hsum = attn + x
    mu = jnp.mean(hsum, axis=-1, keepdims=True)
    var = jnp.mean((hsum - mu) ** 2, axis=-1, keepdims=True)
    hnorm = (hsum - mu) * jax.lax.rsqrt(var + eps)
    out = hnorm * gamma_ref[...] + beta_ref[...]
    out = out * xm_ref[...].reshape(nb * n_t, 1)
    o_ref[...] = out.reshape(nb, n_t, n_f)


def _pick_batch_block(n_b, n_t, n_a, n_f, max_block=8,
                      byte_budget=12 * 1024 * 1024):
    """Largest divisor of n_b that (a) keeps the grid length >= 2 so both v7x
    TensorCores get work, and (b) keeps per-step activation bytes modest so the
    double-buffered blocks stay well inside the 48 MiB VMEM budget."""
    def act_bytes(blk):
        return blk * (2 * n_t * n_f * 4 + n_a * n_f * 4 + n_t * n_a + n_t * 4)
    best = 1
    for blk in range(1, min(max_block, n_b) + 1):
        if n_b % blk != 0:
            continue
        if n_b >= 2 and n_b // blk < 2:
            continue
        if blk > 1 and act_bytes(blk) > byte_budget:
            continue
        best = blk
    return best


def cross_attention(x, y, mask, x_mask, wq, wk, wv, gamma, beta,
                    *, num_head, temperature_coeff=2.0, eps=1e-5):
    n_b, n_t, n_f = x.shape
    n_a = y.shape[1]
    assert n_f % num_head == 0
    d = n_f // num_head
    inv_temp = 1.0 / ((temperature_coeff * d) ** 0.5)

    # nn.Linear weight is (out_features, in_features): pre-transpose once so the
    # kernel computes q = x @ Wq with no in-kernel transpose.  bf16 halves the
    # weight DMA/VMEM bytes and hits the native MXU path on v5e/v6e/v7x.
    wq_t = jnp.asarray(wq, jnp.float32).T.astype(jnp.bfloat16)
    wk_t = jnp.asarray(wk, jnp.float32).T.astype(jnp.bfloat16)
    wv_t = jnp.asarray(wv, jnp.float32).T.astype(jnp.bfloat16)

    # Attention mask as int8 (nonzero => masked); -1e30 bias is built in-kernel.
    mask_i8 = jnp.asarray(mask).reshape(n_b, n_t, n_a).astype(jnp.int8)

    gamma2 = jnp.asarray(gamma, jnp.float32).reshape(1, n_f)
    beta2 = jnp.asarray(beta, jnp.float32).reshape(1, n_f)
    xm = jnp.asarray(x_mask, jnp.float32)
    x = jnp.asarray(x, jnp.float32)
    y = jnp.asarray(y, jnp.float32)

    b_blk = _pick_batch_block(n_b, n_t, n_a, n_f)
    grid = (n_b // b_blk,)

    kernel = partial(cross_attention_kernel, num_head=num_head, head_dim=d,
                     inv_temp=inv_temp, eps=eps)

    return pl.pallas_call(
        kernel,
        out_shape=jax.ShapeDtypeStruct((n_b, n_t, n_f), jnp.float32),
        grid_spec=pltpu.PrefetchScalarGridSpec(
            num_scalar_prefetch=0,
            grid=grid,
            in_specs=[
                pl.BlockSpec((b_blk, n_t, n_f), lambda b: (b, 0, 0)),   # x
                pl.BlockSpec((b_blk, n_a, n_f), lambda b: (b, 0, 0)),   # y
                pl.BlockSpec((b_blk, n_t, n_a), lambda b: (b, 0, 0)),   # mask (int8)
                pl.BlockSpec((b_blk, n_t, 1), lambda b: (b, 0, 0)),     # x_mask
                pl.BlockSpec((n_f, n_f), lambda b: (0, 0)),             # Wq^T (bf16)
                pl.BlockSpec((n_f, n_f), lambda b: (0, 0)),             # Wk^T (bf16)
                pl.BlockSpec((n_f, n_f), lambda b: (0, 0)),             # Wv^T (bf16)
                pl.BlockSpec((1, n_f), lambda b: (0, 0)),               # gamma
                pl.BlockSpec((1, n_f), lambda b: (0, 0)),               # beta
            ],
            out_specs=pl.BlockSpec((b_blk, n_t, n_f), lambda b: (b, 0, 0)),
        ),
        compiler_params=pltpu.CompilerParams(
            dimension_semantics=("parallel",),
            vmem_limit_bytes=48 * 1024 * 1024,
        ),
    )(x, y, mask_i8, xm, wq_t, wk_t, wv_t, gamma2, beta2)


def reference(x, y, mask, x_mask, wq, wk, wv, gamma, beta,
              *, num_head, temperature_coeff=2.0, eps=1e-5):
    """Pure-JAX (f32) port of the PyTorch forward for correctness checking."""
    n_b, n_t, n_f = x.shape
    n_a = y.shape[1]
    d = n_f // num_head
    tp = (temperature_coeff * d) ** 0.5
    q = (x @ wq.T).reshape(n_b, n_t, num_head, d).transpose(2, 0, 1, 3)
    k_t = (y @ wk.T).reshape(n_b, n_a, num_head, d).transpose(2, 0, 3, 1)
    v = (y @ wv.T).reshape(n_b, n_a, num_head, d).transpose(2, 0, 1, 3)
    a = (q @ k_t) / tp
    a = jnp.where(mask, -jnp.inf, a)
    alpha = jax.nn.softmax(a, axis=-1)
    attn = (alpha @ v).transpose(1, 2, 0, 3).reshape(n_b, n_t, n_f)
    h = attn + x
    mu = h.mean(-1, keepdims=True)
    var = ((h - mu) ** 2).mean(-1, keepdims=True)
    out = (h - mu) / jnp.sqrt(var + eps) * gamma + beta
    return out * x_mask


if __name__ == "__main__":
    # Small shapes consistent with the module: channel=32, num_head=4 -> d=8
    n_b, n_t, n_a, n_f, num_head = 2, 16, 8, 32, 4

    key = jax.random.PRNGKey(0)
    kx, ky, kq, kk, kv, kg, kb, km, kxm = jax.random.split(key, 9)

    x = jax.random.normal(kx, (n_b, n_t, n_f), dtype=jnp.float32)
    y = jax.random.normal(ky, (n_b, n_a, n_f), dtype=jnp.float32)

    # nn.Linear weights are (out, in); LayerNorm affine params.
    wq = jax.random.normal(kq, (n_f, n_f), dtype=jnp.float32) * 0.05
    wk = jax.random.normal(kk, (n_f, n_f), dtype=jnp.float32) * 0.05
    wv = jax.random.normal(kv, (n_f, n_f), dtype=jnp.float32) * 0.05
    gamma = 1.0 + 0.1 * jax.random.normal(kg, (n_f,), dtype=jnp.float32)
    beta = 0.1 * jax.random.normal(kb, (n_f,), dtype=jnp.float32)

    # Boolean attention mask (True => masked); keep column 0 unmasked so the
    # -inf reference never produces a fully-masked (NaN) row in the comparison.
    mask = jax.random.uniform(km, (1, n_b, n_t, n_a)) < 0.25
    mask = mask.at[..., 0].set(False)

    x_mask = (jax.random.uniform(kxm, (n_b, n_t, 1)) > 0.2).astype(jnp.float32)

    out = cross_attention(x, y, mask, x_mask, wq, wk, wv, gamma, beta,
                          num_head=num_head)
    out = jax.block_until_ready(out)

    ref = reference(x, y, mask, x_mask, wq, wk, wv, gamma, beta,
                    num_head=num_head)
    assert out.shape == (n_b, n_t, n_f)
    # Tolerance accounts for bf16 MXU operands (weights + activations feeding
    # the matmuls); accumulation and all elementwise math remain f32.
    assert jnp.allclose(out, ref, atol=2e-2, rtol=2e-2), (
        f"max abs err = {jnp.max(jnp.abs(out - ref))}")

    print("KERNEL_OK")
</pallas_src>

<mosaic_0001>
module attributes {stable_mosaic.version = 11 : i64} {
  func.func @cross_attention_kernel(%arg0: i32, %arg1: memref<1x16x32xf32, #tpu.memory_space<vmem>>, %arg2: memref<1x8x32xf32, #tpu.memory_space<vmem>>, %arg3: memref<1x16x8xi8, #tpu.memory_space<vmem>>, %arg4: memref<1x16x1xf32, #tpu.memory_space<vmem>>, %arg5: memref<32x32xbf16, #tpu.memory_space<vmem>>, %arg6: memref<32x32xbf16, #tpu.memory_space<vmem>>, %arg7: memref<32x32xbf16, #tpu.memory_space<vmem>>, %arg8: memref<1x32xf32, #tpu.memory_space<vmem>>, %arg9: memref<1x32xf32, #tpu.memory_space<vmem>>, %arg10: memref<1x16x32xf32, #tpu.memory_space<vmem>>) attributes {dimension_semantics = [#tpu.dimension_semantics<parallel>], iteration_bounds = array<i64: 2>, scalar_prefetch = 0 : i64, scratch_operands = 0 : i64, tpu.core_type = #tpu.core_type<tc>, window_params = [{transform_indices = @transform_0, window_bounds = array<i64: 1, 16, 32>}, {transform_indices = @transform_1, window_bounds = array<i64: 1, 8, 32>}, {transform_indices = @transform_2, window_bounds = array<i64: 1, 16, 8>}, {transform_indices = @transform_3, window_bounds = array<i64: 1, 16, 1>}, {pipeline_mode = #tpu.pipeline_mode<synchronous>, transform_indices = @transform_4, window_bounds = array<i64: 32, 32>}, {pipeline_mode = #tpu.pipeline_mode<synchronous>, transform_indices = @transform_5, window_bounds = array<i64: 32, 32>}, {pipeline_mode = #tpu.pipeline_mode<synchronous>, transform_indices = @transform_6, window_bounds = array<i64: 32, 32>}, {pipeline_mode = #tpu.pipeline_mode<synchronous>, transform_indices = @transform_7, window_bounds = array<i64: 1, 32>}, {pipeline_mode = #tpu.pipeline_mode<synchronous>, transform_indices = @transform_8, window_bounds = array<i64: 1, 32>}, {transform_indices = @transform_9, window_bounds = array<i64: 1, 16, 32>}]} {
    %c0 = arith.constant 0 : index
    %c0_0 = arith.constant 0 : index
    %c0_1 = arith.constant 0 : index
    %0 = vector.load %arg1[%c0, %c0_0, %c0_1] : memref<1x16x32xf32, #tpu.memory_space<vmem>>, vector<1x16x32xf32>
    %1 = vector.shape_cast %0 : vector<1x16x32xf32> to vector<16x32xf32>
    %c0_2 = arith.constant 0 : index
    %c0_3 = arith.constant 0 : index
    %c0_4 = arith.constant 0 : index
    %2 = vector.load %arg2[%c0_2, %c0_3, %c0_4] : memref<1x8x32xf32, #tpu.memory_space<vmem>>, vector<1x8x32xf32>
    %3 = vector.shape_cast %2 : vector<1x8x32xf32> to vector<8x32xf32>
    %4 = arith.truncf %1 : vector<16x32xf32> to vector<16x32xbf16>
    %5 = arith.truncf %3 : vector<8x32xf32> to vector<8x32xbf16>
    %c0_5 = arith.constant 0 : index
    %c0_6 = arith.constant 0 : index
    %6 = vector.load %arg5[%c0_5, %c0_6] : memref<32x32xbf16, #tpu.memory_space<vmem>>, vector<32x32xbf16>
    %cst = arith.constant dense<0.000000e+00> : vector<16x32xf32>
    %7 = tpu.matmul %4, %6, %cst {dimension_numbers = #tpu.dot_dimension_numbers<[1], [0], [0], [1], [0, 0, 1, 1], [], []>} : vector<16x32xbf16>, vector<32x32xbf16>, vector<16x32xf32> -> vector<16x32xf32>
    %c0_7 = arith.constant 0 : index
    %c0_8 = arith.constant 0 : index
    %8 = vector.load %arg6[%c0_7, %c0_8] : memref<32x32xbf16, #tpu.memory_space<vmem>>, vector<32x32xbf16>
    %cst_9 = arith.constant dense<0.000000e+00> : vector<8x32xf32>
    %9 = tpu.matmul %5, %8, %cst_9 {dimension_numbers = #tpu.dot_dimension_numbers<[1], [0], [0], [1], [0, 0, 1, 1], [], []>} : vector<8x32xbf16>, vector<32x32xbf16>, vector<8x32xf32> -> vector<8x32xf32>
    %c0_10 = arith.constant 0 : index
    %c0_11 = arith.constant 0 : index
    %10 = vector.load %arg7[%c0_10, %c0_11] : memref<32x32xbf16, #tpu.memory_space<vmem>>, vector<32x32xbf16>
    %cst_12 = arith.constant dense<0.000000e+00> : vector<8x32xf32>
    %11 = tpu.matmul %5, %10, %cst_12 {dimension_numbers = #tpu.dot_dimension_numbers<[1], [0], [0], [1], [0, 0, 1, 1], [], []>} : vector<8x32xbf16>, vector<32x32xbf16>, vector<8x32xf32> -> vector<8x32xf32>
    %cst_13 = arith.constant 2.500000e-01 : f32
    %12 = vector.broadcast %cst_13 : f32 to vector<16x32xf32>
    %13 = arith.mulf %7, %12 : vector<16x32xf32>
    %14 = arith.truncf %13 : vector<16x32xf32> to vector<16x32xbf16>
    %15 = arith.truncf %9 : vector<8x32xf32> to vector<8x32xbf16>
    %16 = arith.truncf %11 : vector<8x32xf32> to vector<8x32xbf16>
    %17 = vector.extract_strided_slice %14 {offsets = [0, 0], sizes = [16, 8], strides = [1, 1]} : vector<16x32xbf16> to vector<16x8xbf16>
    %18 = vector.shape_cast %17 : vector<16x8xbf16> to vector<1x1x16x8xbf16>
    %19 = vector.extract_strided_slice %14 {offsets = [0, 8], sizes = [16, 8], strides = [1, 1]} : vector<16x32xbf16> to vector<16x8xbf16>
    %20 = vector.shape_cast %19 : vector<16x8xbf16> to vector<1x1x16x8xbf16>
    %21 = vector.extract_strided_slice %14 {offsets = [0, 16], sizes = [16, 8], strides = [1, 1]} : vector<16x32xbf16> to vector<16x8xbf16>
    %22 = vector.shape_cast %21 : vector<16x8xbf16> to vector<1x1x16x8xbf16>
    %23 = vector.extract_strided_slice %14 {offsets = [0, 24], sizes = [16, 8], strides = [1, 1]} : vector<16x32xbf16> to vector<16x8xbf16>
    %24 = vector.shape_cast %23 : vector<16x8xbf16> to vector<1x1x16x8xbf16>
    %25 = tpu.concatenate %18, %20, %22, %24 in 0 : vector<1x1x16x8xbf16>, vector<1x1x16x8xbf16>, vector<1x1x16x8xbf16>, vector<1x1x16x8xbf16> -> vector<4x1x16x8xbf16>
    %26 = vector.shape_cast %25 : vector<4x1x16x8xbf16> to vector<4x16x8xbf16>
    %27 = vector.extract_strided_slice %15 {offsets = [0, 0], sizes = [8, 8], strides = [1, 1]} : vector<8x32xbf16> to vector<8x8xbf16>
    %28 = vector.shape_cast %27 : vector<8x8xbf16> to vector<1x1x8x8xbf16>
    %29 = vector.extract_strided_slice %15 {offsets = [0, 8], sizes = [8, 8], strides = [1, 1]} : vector<8x32xbf16> to vector<8x8xbf16>
    %30 = vector.shape_cast %29 : vector<8x8xbf16> to vector<1x1x8x8xbf16>
    %31 = vector.extract_strided_slice %15 {offsets = [0, 16], sizes = [8, 8], strides = [1, 1]} : vector<8x32xbf16> to vector<8x8xbf16>
    %32 = vector.shape_cast %31 : vector<8x8xbf16> to vector<1x1x8x8xbf16>
    %33 = vector.extract_strided_slice %15 {offsets = [0, 24], sizes = [8, 8], strides = [1, 1]} : vector<8x32xbf16> to vector<8x8xbf16>
    %34 = vector.shape_cast %33 : vector<8x8xbf16> to vector<1x1x8x8xbf16>
    %35 = tpu.concatenate %28, %30, %32, %34 in 0 : vector<1x1x8x8xbf16>, vector<1x1x8x8xbf16>, vector<1x1x8x8xbf16>, vector<1x1x8x8xbf16> -> vector<4x1x8x8xbf16>
    %36 = vector.shape_cast %35 : vector<4x1x8x8xbf16> to vector<4x8x8xbf16>
    %37 = vector.extract_strided_slice %16 {offsets = [0, 0], sizes = [8, 8], strides = [1, 1]} : vector<8x32xbf16> to vector<8x8xbf16>
    %38 = vector.shape_cast %37 : vector<8x8xbf16> to vector<1x1x8x8xbf16>
    %39 = vector.extract_strided_slice %16 {offsets = [0, 8], sizes = [8, 8], strides = [1, 1]} : vector<8x32xbf16> to vector<8x8xbf16>
    %40 = vector.shape_cast %39 : vector<8x8xbf16> to vector<1x1x8x8xbf16>
    %41 = vector.extract_strided_slice %16 {offsets = [0, 16], sizes = [8, 8], strides = [1, 1]} : vector<8x32xbf16> to vector<8x8xbf16>
    %42 = vector.shape_cast %41 : vector<8x8xbf16> to vector<1x1x8x8xbf16>
    %43 = vector.extract_strided_slice %16 {offsets = [0, 24], sizes = [8, 8], strides = [1, 1]} : vector<8x32xbf16> to vector<8x8xbf16>
    %44 = vector.shape_cast %43 : vector<8x8xbf16> to vector<1x1x8x8xbf16>
    %45 = tpu.concatenate %38, %40, %42, %44 in 0 : vector<1x1x8x8xbf16>, vector<1x1x8x8xbf16>, vector<1x1x8x8xbf16>, vector<1x1x8x8xbf16> -> vector<4x1x8x8xbf16>
    %46 = vector.shape_cast %45 : vector<4x1x8x8xbf16> to vector<4x8x8xbf16>
    "tpu.trace_start"() <{level = 10 : i32, message = "gtd,gad->gta"}> : () -> ()
    %cst_14 = arith.constant dense<0.000000e+00> : vector<4x16x8xf32>
    %47 = tpu.matmul %26, %36, %cst_14 {dimension_numbers = #tpu.dot_dimension_numbers<[2], [2], [1], [1], [0, 0, 0, 1, 1, 1], [0], [0]>} : vector<4x16x8xbf16>, vector<4x8x8xbf16>, vector<4x16x8xf32> -> vector<4x16x8xf32>
    "tpu.trace_stop"() : () -> ()
    %c0_15 = arith.constant 0 : index
    %c0_16 = arith.constant 0 : index
    %c0_17 = arith.constant 0 : index
    %48 = vector.load %arg3[%c0_15, %c0_16, %c0_17] : memref<1x16x8xi8, #tpu.memory_space<vmem>>, vector<1x16x8xi8>
    %49 = arith.sitofp %48 : vector<1x16x8xi8> to vector<1x16x8xf32>
    %cst_18 = arith.constant -1.000000e+30 : f32
    %50 = vector.broadcast %cst_18 : f32 to vector<1x16x8xf32>
    %51 = arith.mulf %49, %50 : vector<1x16x8xf32>
    %52 = vector.shape_cast %47 : vector<4x16x8xf32> to vector<4x1x16x8xf32>
    %53 = vector.shape_cast %51 : vector<1x16x8xf32> to vector<1x1x16x8xf32>
    %54 = vector.broadcast %53 : vector<1x1x16x8xf32> to vector<4x1x16x8xf32>
    %55 = arith.addf %52, %54 : vector<4x1x16x8xf32>
    %56 = vector.shape_cast %55 : vector<4x1x16x8xf32> to vector<4x16x8xf32>
    %cst_19 = arith.constant dense<0xFF800000> : vector<4x16xf32>
    %57 = vector.multi_reduction <maximumf>, %56, %cst_19 [2] : vector<4x16x8xf32> to vector<4x16xf32>
    %58 = vector.shape_cast %57 : vector<4x16xf32> to vector<4x16x1xf32>
    %59 = vector.broadcast %58 : vector<4x16x1xf32> to vector<4x16x8xf32>
    %60 = arith.subf %56, %59 : vector<4x16x8xf32>
    %61 = math.exp %60 : vector<4x16x8xf32>
    %cst_20 = arith.constant dense<0.000000e+00> : vector<4x16xf32>
    %62 = vector.multi_reduction <add>, %61, %cst_20 [2] : vector<4x16x8xf32> to vector<4x16xf32>
    %63 = vector.shape_cast %62 : vector<4x16xf32> to vector<4x16x1xf32>
    %64 = vector.broadcast %63 : vector<4x16x1xf32> to vector<4x16x8xf32>
    %65 = arith.divf %61, %64 : vector<4x16x8xf32>
    %66 = arith.truncf %65 : vector<4x16x8xf32> to vector<4x16x8xbf16>
    "tpu.trace_start"() <{level = 10 : i32, message = "gta,gad->gtd"}> : () -> ()
    %cst_21 = arith.constant dense<0.000000e+00> : vector<4x16x8xf32>
    %67 = tpu.matmul %66, %46, %cst_21 {dimension_numbers = #tpu.dot_dimension_numbers<[2], [1], [1], [2], [0, 0, 0, 1, 1, 2], [0], [0]>} : vector<4x16x8xbf16>, vector<4x8x8xbf16>, vector<4x16x8xf32> -> vector<4x16x8xf32>
    "tpu.trace_stop"() : () -> ()
    %68 = vector.shape_cast %67 : vector<4x16x8xf32> to vector<4x1x16x8xf32>
    %69 = vector.extract_strided_slice %68 {offsets = [0, 0, 0, 0], sizes = [1, 1, 16, 8], strides = [1, 1, 1, 1]} : vector<4x1x16x8xf32> to vector<1x1x16x8xf32>
    %70 = vector.shape_cast %69 : vector<1x1x16x8xf32> to vector<1x16x8xf32>
    %71 = vector.extract_strided_slice %68 {offsets = [1, 0, 0, 0], sizes = [1, 1, 16, 8], strides = [1, 1, 1, 1]} : vector<4x1x16x8xf32> to vector<1x1x16x8xf32>
    %72 = vector.shape_cast %71 : vector<1x1x16x8xf32> to vector<1x16x8xf32>
    %73 = vector.extract_strided_slice %68 {offsets = [2, 0, 0, 0], sizes = [1, 1, 16, 8], strides = [1, 1, 1, 1]} : vector<4x1x16x8xf32> to vector<1x1x16x8xf32>
    %74 = vector.shape_cast %73 : vector<1x1x16x8xf32> to vector<1x16x8xf32>
    %75 = vector.extract_strided_slice %68 {offsets = [3, 0, 0, 0], sizes = [1, 1, 16, 8], strides = [1, 1, 1, 1]} : vector<4x1x16x8xf32> to vector<1x1x16x8xf32>
    %76 = vector.shape_cast %75 : vector<1x1x16x8xf32> to vector<1x16x8xf32>
    %77 = tpu.concatenate %70, %72, %74, %76 in 2 : vector<1x16x8xf32>, vector<1x16x8xf32>, vector<1x16x8xf32>, vector<1x16x8xf32> -> vector<1x16x32xf32>
    %78 = vector.shape_cast %77 : vector<1x16x32xf32> to vector<16x32xf32>
    %79 = arith.addf %78, %1 : vector<16x32xf32>
    %cst_22 = arith.constant dense<0.000000e+00> : vector<16xf32>
    %80 = vector.multi_reduction <add>, %79, %cst_22 [1] : vector<16x32xf32> to vector<16xf32>
    %81 = vector.shape_cast %80 : vector<16xf32> to vector<16x1xf32>
    %cst_23 = arith.constant 3.200000e+01 : f32
    %82 = vector.broadcast %cst_23 : f32 to vector<16x1xf32>
    %83 = arith.divf %81, %82 : vector<16x1xf32>
    %84 = vector.broadcast %83 : vector<16x1xf32> to vector<16x32xf32>
    %85 = arith.subf %79, %84 : vector<16x32xf32>
    %86 = arith.mulf %85, %85 : vector<16x32xf32>
    %cst_24 = arith.constant dense<0.000000e+00> : vector<16xf32>
    %87 = vector.multi_reduction <add>, %86, %cst_24 [1] : vector<16x32xf32> to vector<16xf32>
    %88 = vector.shape_cast %87 : vector<16xf32> to vector<16x1xf32>
    %cst_25 = arith.constant 3.200000e+01 : f32
    %89 = vector.broadcast %cst_25 : f32 to vector<16x1xf32>
    %90 = arith.divf %88, %89 : vector<16x1xf32>
    %91 = vector.broadcast %83 : vector<16x1xf32> to vector<16x32xf32>
    %92 = arith.subf %79, %91 : vector<16x32xf32>
    %cst_26 = arith.constant 9.99999974E-6 : f32
    %93 = vector.broadcast %cst_26 : f32 to vector<16x1xf32>
    %94 = arith.addf %90, %93 : vector<16x1xf32>
    %95 = math.rsqrt %94 : vector<16x1xf32>
    %96 = vector.broadcast %95 : vector<16x1xf32> to vector<16x32xf32>
    %97 = arith.mulf %92, %96 : vector<16x32xf32>
    %c0_27 = arith.constant 0 : index
    %c0_28 = arith.constant 0 : index
    %98 = vector.load %arg8[%c0_27, %c0_28] : memref<1x32xf32, #tpu.memory_space<vmem>>, vector<1x32xf32>
    %99 = vector.broadcast %98 : vector<1x32xf32> to vector<16x32xf32>
    %100 = arith.mulf %97, %99 : vector<16x32xf32>
    %c0_29 = arith.constant 0 : index
    %c0_30 = arith.constant 0 : index
    %101 = vector.load %arg9[%c0_29, %c0_30] : memref<1x32xf32, #tpu.memory_space<vmem>>, vector<1x32xf32>
    %102 = vector.broadcast %101 : vector<1x32xf32> to vector<16x32xf32>
    %103 = arith.addf %100, %102 : vector<16x32xf32>
    %c0_31 = arith.constant 0 : index
    %c0_32 = arith.constant 0 : index
    %c0_33 = arith.constant 0 : index
    %104 = vector.load %arg4[%c0_31, %c0_32, %c0_33] : memref<1x16x1xf32, #tpu.memory_space<vmem>>, vector<1x16x1xf32>
    %105 = vector.shape_cast %104 : vector<1x16x1xf32> to vector<16x1xf32>
    %106 = vector.broadcast %105 : vector<16x1xf32> to vector<16x32xf32>
    %107 = arith.mulf %103, %106 : vector<16x32xf32>
    %108 = vector.shape_cast %107 : vector<16x32xf32> to vector<1x16x32xf32>
    %c0_34 = arith.constant 0 : index
    %c0_35 = arith.constant 0 : index
    %c0_36 = arith.constant 0 : index
    %109 = vector.load %arg10[%c0_34, %c0_35, %c0_36] : memref<1x16x32xf32, #tpu.memory_space<vmem>>, vector<1x16x32xf32>
    tpu.vector_store %arg10[%c0_34, %c0_35, %c0_36], %108 {strides = array<i32>} : memref<1x16x32xf32, #tpu.memory_space<vmem>>, vector<1x16x32xf32>,
    return
  }
  func.func @transform_0(%arg0: i32) -> (i32, i32, i32) {
    %c0_i32 = arith.constant 0 : i32
    %c0_i32_0 = arith.constant 0 : i32
    %c0_i32_1 = arith.constant 0 : i32
    return %arg0, %c0_i32, %c0_i32_0 : i32, i32, i32
  }
  func.func @transform_1(%arg0: i32) -> (i32, i32, i32) {
    %c0_i32 = arith.constant 0 : i32
    %c0_i32_0 = arith.constant 0 : i32
    %c0_i32_1 = arith.constant 0 : i32
    return %arg0, %c0_i32, %c0_i32_0 : i32, i32, i32
  }
  func.func @transform_2(%arg0: i32) -> (i32, i32, i32) {
    %c0_i32 = arith.constant 0 : i32
    %c0_i32_0 = arith.constant 0 : i32
    %c0_i32_1 = arith.constant 0 : i32
    return %arg0, %c0_i32, %c0_i32_0 : i32, i32, i32
  }
  func.func @transform_3(%arg0: i32) -> (i32, i32, i32) {
    %c0_i32 = arith.constant 0 : i32
    %c0_i32_0 = arith.constant 0 : i32
    %c0_i32_1 = arith.constant 0 : i32
    return %arg0, %c0_i32, %c0_i32_0 : i32, i32, i32
  }
  func.func @transform_4(%arg0: i32) -> (i32, i32) {
    %c0_i32 = arith.constant 0 : i32
    %c0_i32_0 = arith.constant 0 : i32
    %c0_i32_1 = arith.constant 0 : i32
    return %c0_i32, %c0_i32_0 : i32, i32
  }
  func.func @transform_5(%arg0: i32) -> (i32, i32) {
    %c0_i32 = arith.constant 0 : i32
    %c0_i32_0 = arith.constant 0 : i32
    %c0_i32_1 = arith.constant 0 : i32
    return %c0_i32, %c0_i32_0 : i32, i32
  }
  func.func @transform_6(%arg0: i32) -> (i32, i32) {
    %c0_i32 = arith.constant 0 : i32
    %c0_i32_0 = arith.constant 0 : i32
    %c0_i32_1 = arith.constant 0 : i32
    return %c0_i32, %c0_i32_0 : i32, i32
  }
  func.func @transform_7(%arg0: i32) -> (i32, i32) {
    %c0_i32 = arith.constant 0 : i32
    %c0_i32_0 = arith.constant 0 : i32
    %c0_i32_1 = arith.constant 0 : i32
    return %c0_i32, %c0_i32_0 : i32, i32
  }
  func.func @transform_8(%arg0: i32) -> (i32, i32) {
    %c0_i32 = arith.constant 0 : i32
    %c0_i32_0 = arith.constant 0 : i32
    %c0_i32_1 = arith.constant 0 : i32
    return %c0_i32, %c0_i32_0 : i32, i32
  }
  func.func @transform_9(%arg0: i32) -> (i32, i32, i32) {
    %c0_i32 = arith.constant 0 : i32
    %c0_i32_0 = arith.constant 0 : i32
    %c0_i32_1 = arith.constant 0 : i32
    return %arg0, %c0_i32, %c0_i32_0 : i32, i32, i32
  }
}

</mosaic_0001>

<llo_original>
// kernel: tpu_custom_call.1
$region0: #{tpu_custom_call.1}
  #allocation0 [shape = 'u32[]', space=smem, size = 0x4, offset = 0x4, fixed_abs, tag = 'smem constant byte address 0x4 - core index']
  #allocation1 [shape = 'u32[144,128]{1,0:T(1,128)}', space=vmem, size = 0x12000, scoped, tag = 'internal scratch']
  %s0 = inlined_call_operand.vmem [shape: f32[2,16,32], index: 0, kind: input, shape index: {}]
  %s1 = inlined_call_operand.hbm [shape: f32[2,8,32], index: 1, kind: input, shape index: {}]
  %s2 = inlined_call_operand.vmem [shape: s8[2,16,8], index: 2, kind: input, shape index: {}]
  %s3 = inlined_call_operand.vmem [shape: f32[2,16,1], index: 3, kind: input, shape index: {}]
  %s4 = inlined_call_operand.vmem [shape: bf16[32,32], index: 4, kind: input, shape index: {}]
  %s5 = inlined_call_operand.hbm [shape: bf16[32,32], index: 5, kind: input, shape index: {}]
  %s6 = inlined_call_operand.hbm [shape: bf16[32,32], index: 6, kind: input, shape index: {}]
  %s7 = inlined_call_operand.vmem [shape: f32[1,32], index: 7, kind: input, shape index: {}]
  %s8 = inlined_call_operand.vmem [shape: f32[1,32], index: 8, kind: input, shape index: {}]
  %s9 = inlined_call_operand.hbm [shape: f32[2,16,32], index: 9, kind: output, shape index: {}]
  %s10 = sld [smem:[#allocation0]]
  $region81: #{tpu_custom_call.1} parent=0
    _
  %s12 = ssub.s32 1, %s10
  %s13 = scalar_select 0, %s12, %s10
  $region1: #{tpu_custom_call.1} parent=0
    #allocation2 [shape = 'u8[8192]{0}', space=vmem, size = 0x2000, scoped, tag = 'input window, operand 1']
    #allocation3 [shape = 's32[2]{0}', space=sflag, size = 0x8, scoped, tag = 'scoped memory for tpu_custom_call.1']
    #allocation4 [shape = 's32[2]{0}', space=sflag, size = 0x8, scoped, tag = 'scoped memory for tpu_custom_call.1']
    #allocation5 [shape = 'u8[8192]{0}', space=vmem, size = 0x2000, scoped, tag = 'input window, operand 5, single buffered']
    #allocation6 [shape = 's32[1]{0}', space=sflag, size = 0x4, scoped, tag = 'scoped memory for tpu_custom_call.1']
    #allocation7 [shape = 'u8[8192]{0}', space=vmem, size = 0x2000, scoped, tag = 'input window, operand 6, single buffered']
    #allocation8 [shape = 'u8[16384]{0}', space=vmem, size = 0x4000, scoped, tag = 'output window, operand 0']
    %14 = vsyncpa [#allocation3], 0
    %s15 = scalar_lea.sflag [#allocation3], 1
    %16 = vsyncpa %s15, 0
    %17 = vsyncpa [#allocation6], 0
    %18 = vsyncpa [#allocation4], 0
    %s19 = scalar_lea.sflag [#allocation4], 1
    %20 = vsyncpa %s19, 0
    loop: start=0, step=1, limit=4
    $region2: #{tpu_custom_call.1} parent=1 // loop_pre_header
      _
    $region3: #{tpu_custom_call.1} parent=1 // loop_header
      %s22 = sphi 0, %s26
      %p23 = scmp.ge.s32.totalorder %s22, 4
      %s32 = sphi 0, %s34
      %s35 = sphi 0, %s32
      %s36 = sphi 0, %s35
      %s52 = sphi 0, %s36
      %s58 = sphi 0, %s60
      %s61 = sphi 0, %s58
      %s62 = sphi 0, %s61
      %s78 = sphi 0, %s62
      %s84 = sphi 0, %s86
      %s87 = sphi 0, %s84
      %s88 = sphi 0, %s87
      %s104 = sphi 0, %s88
      %s110 = sphi 0, %s112
      %s113 = sphi 0, %s110
      %s114 = sphi 0, %s113
      %s130 = sphi 0, %s114
      %s134 = sphi 0, %s134
      %s136 = sphi 0, %s134
      %s137 = sphi 0, %s136
      %s151 = sphi 0, %s137
      %s155 = sphi 0, %s155
      %s157 = sphi 0, %s155
      %s158 = sphi 0, %s157
      %s172 = sphi 0, %s158
      %s176 = sphi 0, %s176
      %s178 = sphi 0, %s176
      %s179 = sphi 0, %s178
      %s193 = sphi 0, %s179
      %s197 = sphi 0, %s197
      %s199 = sphi 0, %s197
      %s200 = sphi 0, %s199
      %s214 = sphi 0, %s200
      %s218 = sphi 0, %s218
      %s220 = sphi 0, %s218
      %s221 = sphi 0, %s220
      %s235 = sphi 0, %s221
      %s241 = sphi 0, %s243
      %s244 = sphi 0, %s241
      %s245 = sphi 0, %s244
      %s261 = sphi 0, %s245
    $region4: #{tpu_custom_call.1} parent=1 // loop_header_branch
      %25 = sbr.rel (%p23) target = $region8
    $region5: #{tpu_custom_call.1} parent=1 // loop_body
      %s27 = ssub.s32 %s22, 1
      %s28 = ssub.s32 %s22, 2
      %s29 = sadd.s32 %s22, 1
      %s30 = ssub.s32 %s22, %s29
      %p31 = scmp.eq.s32.totalorder %s30, 0
      %s33 = sadd.s32 %s32, 1
      %s34 = scalar_select %p31, %s32, %s33
      %p37 = pneg %p31
      %p38 = scmp.eq.s32.totalorder %s22, 1
      %p39 = por %p37, %p38
      %p40 = scmp.ne.s32.totalorder %s32, %s35
      %p41 = scmp.eq.s32.totalorder %s22, 0
      %p42 = por %p40, %p41
      %p43 = scmp.ne.s32.totalorder %s32, %s35
      %p44 = scmp.eq.s32.totalorder %s27, 1
      %p45 = por %p43, %p44
      %p46 = scmp.ne.s32.totalorder %s35, %s36
      %p47 = scmp.eq.s32.totalorder %s27, 0
      %p48 = por %p46, %p47
      %p49 = scmp.ne.s32.totalorder %s35, %s36
      %p50 = scmp.eq.s32.totalorder %s28, 1
      %p51 = por %p49, %p50
      %p53 = scmp.ne.s32.totalorder %s36, %s52
      %p54 = scmp.eq.s32.totalorder %s28, 0
      %p55 = por %p53, %p54
      %s56 = ssub.s32 %s22, %s29
      %p57 = scmp.eq.s32.totalorder %s56, 0
      %s59 = sadd.s32 %s58, 1
      %s60 = scalar_select %p57, %s58, %s59
      %p63 = pneg %p57
      %p64 = scmp.eq.s32.totalorder %s22, 1
      %p65 = por %p63, %p64
      %p66 = scmp.ne.s32.totalorder %s58, %s61
      %p67 = scmp.eq.s32.totalorder %s22, 0
      %p68 = por %p66, %p67
      %p69 = scmp.ne.s32.totalorder %s58, %s61
      %p70 = scmp.eq.s32.totalorder %s27, 1
      %p71 = por %p69, %p70
      %p72 = scmp.ne.s32.totalorder %s61, %s62
      %p73 = scmp.eq.s32.totalorder %s27, 0
      %p74 = por %p72, %p73
      %p75 = scmp.ne.s32.totalorder %s61, %s62
      %p76 = scmp.eq.s32.totalorder %s28, 1
      %p77 = por %p75, %p76
      %p79 = scmp.ne.s32.totalorder %s62, %s78
      %p80 = scmp.eq.s32.totalorder %s28, 0
      %p81 = por %p79, %p80
      %s82 = ssub.s32 %s22, %s29
      %p83 = scmp.eq.s32.totalorder %s82, 0
      %s85 = sadd.s32 %s84, 1
      %s86 = scalar_select %p83, %s84, %s85
      %p89 = pneg %p83
      %p90 = scmp.eq.s32.totalorder %s22, 1
      %p91 = por %p89, %p90
      %p92 = scmp.ne.s32.totalorder %s84, %s87
      %p93 = scmp.eq.s32.totalorder %s22, 0
      %p94 = por %p92, %p93
      %p95 = scmp.ne.s32.totalorder %s84, %s87
      %p96 = scmp.eq.s32.totalorder %s27, 1
      %p97 = por %p95, %p96
      %p98 = scmp.ne.s32.totalorder %s87, %s88
      %p99 = scmp.eq.s32.totalorder %s27, 0
      %p100 = por %p98, %p99
      %p101 = scmp.ne.s32.totalorder %s87, %s88
      %p102 = scmp.eq.s32.totalorder %s28, 1
      %p103 = por %p101, %p102
      %p105 = scmp.ne.s32.totalorder %s88, %s104
      %p106 = scmp.eq.s32.totalorder %s28, 0
      %p107 = por %p105, %p106
      %s108 = ssub.s32 %s22, %s29
      %p109 = scmp.eq.s32.totalorder %s108, 0
      %s111 = sadd.s32 %s110, 1
      %s112 = scalar_select %p109, %s110, %s111
      %p115 = pneg %p109
      %p116 = scmp.eq.s32.totalorder %s22, 1
      %p117 = por %p115, %p116
      %p118 = scmp.ne.s32.totalorder %s110, %s113
      %p119 = scmp.eq.s32.totalorder %s22, 0
      %p120 = por %p118, %p119
      %p121 = scmp.ne.s32.totalorder %s110, %s113
      %p122 = scmp.eq.s32.totalorder %s27, 1
      %p123 = por %p121, %p122
      %p124 = scmp.ne.s32.totalorder %s113, %s114
      %p125 = scmp.eq.s32.totalorder %s27, 0
      %p126 = por %p124, %p125
      %p127 = scmp.ne.s32.totalorder %s113, %s114
      %p128 = scmp.eq.s32.totalorder %s28, 1
      %p129 = por %p127, %p128
      %p131 = scmp.ne.s32.totalorder %s114, %s130
      %p132 = scmp.eq.s32.totalorder %s28, 0
      %p133 = por %p131, %p132
      %s135 = sadd.s32 %s134, 1
      %p138 = scmp.eq.s32.totalorder %s22, 1
      %p139 = scmp.ne.s32.totalorder %s134, %s136
      %p140 = scmp.eq.s32.totalorder %s22, 0
      %p141 = por %p139, %p140
      %p142 = scmp.ne.s32.totalorder %s134, %s136
      %p143 = scmp.eq.s32.totalorder %s27, 1
      %p144 = por %p142, %p143
      %p145 = scmp.ne.s32.totalorder %s136, %s137
      %p146 = scmp.eq.s32.totalorder %s27, 0
      %p147 = por %p145, %p146
      %p148 = scmp.ne.s32.totalorder %s136, %s137
      %p149 = scmp.eq.s32.totalorder %s28, 1
      %p150 = por %p148, %p149
      %p152 = scmp.ne.s32.totalorder %s137, %s151
      %p153 = scmp.eq.s32.totalorder %s28, 0
      %p154 = por %p152, %p153
      %s156 = sadd.s32 %s155, 1
      %p159 = scmp.eq.s32.totalorder %s22, 1
      %p160 = scmp.ne.s32.totalorder %s155, %s157
      %p161 = scmp.eq.s32.totalorder %s22, 0
      %p162 = por %p160, %p161
      %p163 = scmp.ne.s32.totalorder %s155, %s157
      %p164 = scmp.eq.s32.totalorder %s27, 1
      %p165 = por %p163, %p164
      %p166 = scmp.ne.s32.totalorder %s157, %s158
      %p167 = scmp.eq.s32.totalorder %s27, 0
      %p168 = por %p166, %p167
      %p169 = scmp.ne.s32.totalorder %s157, %s158
      %p170 = scmp.eq.s32.totalorder %s28, 1
      %p171 = por %p169, %p170
      %p173 = scmp.ne.s32.totalorder %s158, %s172
      %p174 = scmp.eq.s32.totalorder %s28, 0
      %p175 = por %p173, %p174
      %s177 = sadd.s32 %s176, 1
      %p180 = scmp.eq.s32.totalorder %s22, 1
      %p181 = scmp.ne.s32.totalorder %s176, %s178
      %p182 = scmp.eq.s32.totalorder %s22, 0
      %p183 = por %p181, %p182
      %p184 = scmp.ne.s32.totalorder %s176, %s178
      %p185 = scmp.eq.s32.totalorder %s27, 1
      %p186 = por %p184, %p185
      %p187 = scmp.ne.s32.totalorder %s178, %s179
      %p188 = scmp.eq.s32.totalorder %s27, 0
      %p189 = por %p187, %p188
      %p190 = scmp.ne.s32.totalorder %s178, %s179
      %p191 = scmp.eq.s32.totalorder %s28, 1
      %p192 = por %p190, %p191
      %p194 = scmp.ne.s32.totalorder %s179, %s193
      %p195 = scmp.eq.s32.totalorder %s28, 0
      %p196 = por %p194, %p195
      %s198 = sadd.s32 %s197, 1
      %p201 = scmp.eq.s32.totalorder %s22, 1
      %p202 = scmp.ne.s32.totalorder %s197, %s199
      %p203 = scmp.eq.s32.totalorder %s22, 0
      %p204 = por %p202, %p203
      %p205 = scmp.ne.s32.totalorder %s197, %s199
      %p206 = scmp.eq.s32.totalorder %s27, 1
      %p207 = por %p205, %p206
      %p208 = scmp.ne.s32.totalorder %s199, %s200
      %p209 = scmp.eq.s32.totalorder %s27, 0
      %p210 = por %p208, %p209
      %p211 = scmp.ne.s32.totalorder %s199, %s200
      %p212 = scmp.eq.s32.totalorder %s28, 1
      %p213 = por %p211, %p212
      %p215 = scmp.ne.s32.totalorder %s200, %s214
      %p216 = scmp.eq.s32.totalorder %s28, 0
      %p217 = por %p215, %p216
      %s219 = sadd.s32 %s218, 1
      %p222 = scmp.eq.s32.totalorder %s22, 1
      %p223 = scmp.ne.s32.totalorder %s218, %s220
      %p224 = scmp.eq.s32.totalorder %s22, 0
      %p225 = por %p223, %p224
      %p226 = scmp.ne.s32.totalorder %s218, %s220
      %p227 = scmp.eq.s32.totalorder %s27, 1
      %p228 = por %p226, %p227
      %p229 = scmp.ne.s32.totalorder %s220, %s221
      %p230 = scmp.eq.s32.totalorder %s27, 0
      %p231 = por %p229, %p230
      %p232 = scmp.ne.s32.totalorder %s220, %s221
      %p233 = scmp.eq.s32.totalorder %s28, 1
      %p234 = por %p232, %p233
      %p236 = scmp.ne.s32.totalorder %s221, %s235
      %p237 = scmp.eq.s32.totalorder %s28, 0
      %p238 = por %p236, %p237
      %s239 = ssub.s32 %s22, %s29
      %p240 = scmp.eq.s32.totalorder %s239, 0
      %s242 = sadd.s32 %s241, 1
      %s243 = scalar_select %p240, %s241, %s242
      %p246 = pneg %p240
      %p247 = scmp.eq.s32.totalorder %s22, 1
      %p248 = por %p246, %p247
      %p249 = scmp.ne.s32.totalorder %s241, %s244
      %p250 = scmp.eq.s32.totalorder %s22, 0
      %p251 = por %p249, %p250
      %p252 = scmp.ne.s32.totalorder %s241, %s244
      %p253 = scmp.eq.s32.totalorder %s27, 1
      %p254 = por %p252, %p253
      %p255 = scmp.ne.s32.totalorder %s244, %s245
      %p256 = scmp.eq.s32.totalorder %s27, 0
      %p257 = por %p255, %p256
      %p258 = scmp.ne.s32.totalorder %s244, %s245
      %p259 = scmp.eq.s32.totalorder %s28, 1
      %p260 = por %p258, %p259
      %p262 = scmp.ne.s32.totalorder %s245, %s261
      %p263 = scmp.eq.s32.totalorder %s28, 0
      %p264 = por %p262, %p263
      %p265 = scmp.le.s32.totalorder 1, %s22
      %p266 = scmp.lt.s32.totalorder %s22, 3
      %p267 = pnand %p265, %p266
      %p268 = pneg %p267
      // Predicated region
      $region9: #{tpu_custom_call.1} parent=5 // pred_check
        _
      $region10: #{tpu_custom_call.1} parent=5 // pred_check_branch
        %270 = sbr.rel (%p267) target = $region12
      $region11: #{tpu_custom_call.1} parent=5 // pred_region
        %s271 = ssub.s32 %s22, 1
        // Predicated region
        $region13: #{tpu_custom_call.1} parent=11 // pred_check
          %p272 = pneg %p147
        $region14: #{tpu_custom_call.1} parent=11 // pred_check_branch
          %274 = sbr.rel (%p272) target = $region16
        $region15: #{tpu_custom_call.1} parent=11 // pred_region
          _
        $region16: #{tpu_custom_call.1} parent=11 // pred_fallthru
          _
        // Predicated region
        $region17: #{tpu_custom_call.1} parent=11 // pred_check
          %p275 = pneg %p168
        $region18: #{tpu_custom_call.1} parent=11 // pred_check_branch
          %277 = sbr.rel (%p275) target = $region20
        $region19: #{tpu_custom_call.1} parent=11 // pred_region
          %s279 = ssub.s32 256, 256
          %280 = vsyncadd [#allocation6], %s279
          %s281 = sshll.u32 [#allocation5], 4
          %s282 = int_to_ptr.vmem [resolvable:$true] %s281
          %287 = dma.hbm_to_vmem [thread:$0]  %s5, 256, %s282, [#allocation6], 64, 64, 4
        $region20: #{tpu_custom_call.1} parent=11 // pred_fallthru
          _
        // Predicated region
        $region21: #{tpu_custom_call.1} parent=11 // pred_check
          %p288 = pneg %p189
        $region22: #{tpu_custom_call.1} parent=11 // pred_check_branch
          %290 = sbr.rel (%p288) target = $region24
        $region23: #{tpu_custom_call.1} parent=11 // pred_region
          %s292 = ssub.s32 256, 256
          %293 = vsyncadd [#allocation6], %s292
          %s294 = sshll.u32 [#allocation7], 4
          %s295 = int_to_ptr.vmem [resolvable:$true] %s294
          %300 = dma.hbm_to_vmem [thread:$0]  %s6, 256, %s295, [#allocation6], 64, 64, 4
        $region24: #{tpu_custom_call.1} parent=11 // pred_fallthru
          _
        // Predicated region
        $region25: #{tpu_custom_call.1} parent=11 // pred_check
          %p301 = pneg %p210
        $region26: #{tpu_custom_call.1} parent=11 // pred_check_branch
          %303 = sbr.rel (%p301) target = $region28
        $region27: #{tpu_custom_call.1} parent=11 // pred_region
          _
        $region28: #{tpu_custom_call.1} parent=11 // pred_fallthru
          _
        // Predicated region
        $region29: #{tpu_custom_call.1} parent=11 // pred_check
          %p304 = pneg %p231
        $region30: #{tpu_custom_call.1} parent=11 // pred_check_branch
          %306 = sbr.rel (%p304) target = $region32
        $region31: #{tpu_custom_call.1} parent=11 // pred_region
          _
        $region32: #{tpu_custom_call.1} parent=11 // pred_fallthru
          _
      $region12: #{tpu_custom_call.1} parent=5 // pred_fallthru
        _
      %p307 = scmp.lt.s32.totalorder %s22, 2
      // Predicated region
      $region33: #{tpu_custom_call.1} parent=5 // pred_check
        %p308 = pneg %p307
      $region34: #{tpu_custom_call.1} parent=5 // pred_check_branch
        %310 = sbr.rel (%p308) target = $region36
      $region35: #{tpu_custom_call.1} parent=5 // pred_region
        // Predicated region
        $region37: #{tpu_custom_call.1} parent=35 // pred_check
          %p311 = pneg %p42
        $region38: #{tpu_custom_call.1} parent=35 // pred_check_branch
          %313 = sbr.rel (%p311) target = $region40
        $region39: #{tpu_custom_call.1} parent=35 // pred_region
          %p314 = scmp.lt.s32.totalorder %s22, 1
          %s315 = scalar_select %p314, %s22, 1
          %s316 = smul.addr %s315, 2
          %s317 = smul.addr %s316, 8
          %s318 = scalar_lea.vmem %s0, %s317
        $region40: #{tpu_custom_call.1} parent=35 // pred_fallthru
          _
        // Predicated region
        $region41: #{tpu_custom_call.1} parent=35 // pred_check
          %p319 = pneg %p68
        $region42: #{tpu_custom_call.1} parent=35 // pred_check_branch
          %321 = sbr.rel (%p319) target = $region44
        $region43: #{tpu_custom_call.1} parent=35 // pred_region
          %s322 = sand.u32 %s58, 1
          %s323 = scalar_lea.sflag [#allocation3], %s322
          %s324 = sand.u32 %s58, 1
          %s325 = smul.addr %s324, 8
          %s326 = scalar_lea.vmem [#allocation2], %s325
          %s328 = ssub.s32 128, 128
          %329 = vsyncadd %s323, %s328
          %s330 = smul.addr %s22, 128
          %s331 = scalar_lea.hbm %s1, %s330
          %s333 = sshll.u32 %s326, 4
          %s334 = int_to_ptr.vmem [resolvable:$true] %s333
          %336 = dma.hbm_to_vmem [thread:$0]  %s331, 128, %s334, %s323
        $region44: #{tpu_custom_call.1} parent=35 // pred_fallthru
          _
        // Predicated region
        $region45: #{tpu_custom_call.1} parent=35 // pred_check
          %p337 = pneg %p94
        $region46: #{tpu_custom_call.1} parent=35 // pred_check_branch
          %339 = sbr.rel (%p337) target = $region48
        $region47: #{tpu_custom_call.1} parent=35 // pred_region
          %p340 = scmp.lt.s32.totalorder %s22, 1
          %s341 = scalar_select %p340, %s22, 1
          %s342 = smul.addr %s341, 2
          %s343 = smul.addr %s342, 2
          %s344 = scalar_lea.vmem %s2, %s343
        $region48: #{tpu_custom_call.1} parent=35 // pred_fallthru
          _
        // Predicated region
        $region49: #{tpu_custom_call.1} parent=35 // pred_check
          %p345 = pneg %p120
        $region50: #{tpu_custom_call.1} parent=35 // pred_check_branch
          %347 = sbr.rel (%p345) target = $region52
        $region51: #{tpu_custom_call.1} parent=35 // pred_region
          %p348 = scmp.lt.s32.totalorder %s22, 1
          %s349 = scalar_select %p348, %s22, 1
          %s350 = smul.addr %s349, 2
          %s351 = smul.addr %s350, 8
          %s352 = scalar_lea.vmem %s3, %s351
        $region52: #{tpu_custom_call.1} parent=35 // pred_fallthru
          _
      $region36: #{tpu_custom_call.1} parent=5 // pred_fallthru
        _
      %p353 = scmp.le.s32.totalorder 1, %s22
      %p354 = scmp.lt.s32.totalorder %s22, 3
      %p355 = pnand %p353, %p354
      %p356 = pneg %p355
      // Predicated region
      $region53: #{tpu_custom_call.1} parent=5 // pred_check
        _
      $region54: #{tpu_custom_call.1} parent=5 // pred_check_branch
        %358 = sbr.rel (%p355) target = $region56
      $region55: #{tpu_custom_call.1} parent=5 // pred_region
        %s359 = ssub.s32 %s22, 1
        %s360 = sand.u32 %s61, 1
        %s361 = scalar_lea.sflag [#allocation3], %s360
        %s362 = sand.u32 %s61, 1
        %s363 = smul.addr %s362, 8
        %s364 = scalar_lea.vmem [#allocation2], %s363
        // Predicated region
        $region57: #{tpu_custom_call.1} parent=55 // pred_check
          %p365 = pneg %p74
        $region58: #{tpu_custom_call.1} parent=55 // pred_check_branch
          %367 = sbr.rel (%p365) target = $region60
        $region59: #{tpu_custom_call.1} parent=55 // pred_region
          %368 = dma.done %s361, 128
        $region60: #{tpu_custom_call.1} parent=55 // pred_fallthru
          _
        // Predicated region
        $region61: #{tpu_custom_call.1} parent=55 // pred_check
          %p369 = pneg %p168
        $region62: #{tpu_custom_call.1} parent=55 // pred_check_branch
          %371 = sbr.rel (%p369) target = $region64
        $region63: #{tpu_custom_call.1} parent=55 // pred_region
          %372 = dma.done [#allocation6], 256
        $region64: #{tpu_custom_call.1} parent=55 // pred_fallthru
          _
        // Predicated region
        $region65: #{tpu_custom_call.1} parent=55 // pred_check
          %p373 = pneg %p189
        $region66: #{tpu_custom_call.1} parent=55 // pred_check_branch
          %375 = sbr.rel (%p373) target = $region68
        $region67: #{tpu_custom_call.1} parent=55 // pred_region
          %376 = dma.done [#allocation6], 256
        $region68: #{tpu_custom_call.1} parent=55 // pred_fallthru
          _
        %p377 = scmp.lt.s32.totalorder %s27, 1
        %s378 = scalar_select %p377, %s27, 1
        %s379 = smul.addr %s378, 2
        %s380 = smul.addr %s379, 8
        %s381 = scalar_lea.vmem %s0, %s380
        %p382 = pneg %p48
        %p383 = pneg %p45
        %s384 = sand.u32 %s61, 1
        %s385 = scalar_lea.sflag [#allocation3], %s384
        %s386 = sand.u32 %s61, 1
        %s387 = smul.addr %s386, 8
        %s388 = scalar_lea.vmem [#allocation2], %s387
        %p389 = pneg %p74
        %p390 = pneg %p71
        %p391 = scmp.lt.s32.totalorder %s27, 1
        %s392 = scalar_select %p391, %s27, 1
        %s393 = smul.addr %s392, 2
        %s394 = smul.addr %s393, 2
        %s395 = scalar_lea.vmem %s2, %s394
        %p396 = pneg %p100
        %p397 = pneg %p97
        %p398 = scmp.lt.s32.totalorder %s27, 1
        %s399 = scalar_select %p398, %s27, 1
        %s400 = smul.addr %s399, 2
        %s401 = smul.addr %s400, 8
        %s402 = scalar_lea.vmem %s3, %s401
        %p403 = pneg %p126
        %p404 = pneg %p123
        %p405 = pneg %p147
        %p406 = pneg %p144
        %p407 = pneg %p168
        %p408 = pneg %p165
        %p409 = pneg %p189
        %p410 = pneg %p186
        %p411 = pneg %p210
        %p412 = pneg %p207
        %p413 = pneg %p231
        %p414 = pneg %p228
        %p415 = pneg %p257
        %p416 = pneg %p254
        %s417 = sand.u32 %s244, 1
        %s418 = scalar_lea.sflag [#allocation4], %s417
        %s419 = sand.u32 %s244, 1
        %s420 = smul.addr %s419, 16
        %s421 = scalar_lea.vmem [#allocation8], %s420
        %p422 = scmp.lt.s32.totalorder %s27, 1
        %s423 = scalar_select %p422, %s27, 1
        %s424 = smul.addr %s423, 2
        %s425 = smul.addr %s424, 8
        %s426 = scalar_lea.vmem %s0, %s425
        %p427 = scmp.lt.s32.totalorder %s27, 1
        %s428 = scalar_select %p427, %s27, 1
        %s429 = smul.addr %s428, 2
        %s430 = smul.addr %s429, 2
        %s431 = scalar_lea.vmem %s2, %s430
        %p432 = scmp.lt.s32.totalorder %s27, 1
        %s433 = scalar_select %p432, %s27, 1
        %s434 = smul.addr %s433, 2
        %s435 = smul.addr %s434, 8
        %s436 = scalar_lea.vmem %s3, %s435
        %v438 = vld [vmem:[%s426] sm:$0xff]
        %v439 = vld [vmem:[%s426 + $0x8] sm:$0xff]
        %v440 = vld [vmem:[%s364] sm:$0xff]
        %v441 = vpack.c.bf16 %v439, %v438
        %v442 = vpack.c.bf16 %v440, %v440
        %v443 = vld [vmem:[%s4] sm:$0xf]
        %v444 = vld [vmem:[%s4 + $0x4] sm:$0xf]
        %v445 = vld [vmem:[%s4 + $0x8] sm:$0xf]
        %v446 = vld [vmem:[%s4 + $0xc] sm:$0xf]
        %v451 = vunpack.c.l.b16 %v443
        %v452 = vunpack.c.l.b16 %v444
        %v453 = vunpack.c.l.b16 %v445
        %v454 = vunpack.c.l.b16 %v446
        %v455 = vpack.c.b16 %v452, %v451
        %v456 = vpack.c.b16 %v454, %v453
        %vm459 = vcmask 261120
        %v461 = vsel %vm459, %v441, 0
        %463 = vmatprep.subr.bf16.mxu0 0
        %464 = vmatpush1.bf16.msra.mxu0 0
        %465 = vmatprep.subr.bf16.mxu0 0
        %466 = vmatpush1.bf16.msra.mxu0 0
        %467 = vmatprep.subr.bf16.mxu0 0
        %468 = vmatpush1.bf16.msra.mxu0 0
        %469 = vmatprep.subr.bf16.mxu0 0
        %470 = vmatpush1.bf16.msra.mxu0 0
        %471 = vmatprep.subr.bf16.mxu0 0
        %472 = vmatpush1.bf16.msra.mxu0 0
        %473 = vmatprep.subr.bf16.mxu0 0
        %474 = vmatpush1.bf16.msra.mxu0 0
        %475 = vmatprep.subr.bf16.mxu0 0
        %476 = vmatpush1.bf16.msra.mxu0 %v456
        %477 = vmatprep.subr.bf16.mxu0 0
        %478 = vmatpush1.bf16.msra.mxu0 %v455
        %479 = vmatprep.subr.bf16.mxu0 0
        %480 = vmatpush2.bf16.msra.mxu0 0
        %481 = vmatprep.subr.bf16.mxu0 0
        %482 = vmatpush2.bf16.msra.mxu0 0
        %483 = vmatprep.subr.bf16.mxu0 0
        %484 = vmatpush2.bf16.msra.mxu0 0
        %485 = vmatprep.subr.bf16.mxu0 0
        %486 = vmatpush2.bf16.msra.mxu0 0
        %487 = vmatprep.subr.bf16.mxu0 0
        %488 = vmatpush2.bf16.msra.mxu0 0
        %489 = vmatprep.subr.bf16.mxu0 0
        %490 = vmatpush2.bf16.msra.mxu0 0
        %491 = vmatprep.subr.bf16.mxu0 0
        %492 = vmatpush2.bf16.msra.mxu0 0
        %493 = vmatprep.subr.bf16.mxu0 0
        %494 = vmatpush2.bf16.msra.mxu0 0
        %495 = vmatprep.mubr.bf16.mxu0 0
        %496 = vmatmul.mubr.bf16.gmra.mxu0 %v461
        %v497 = vpop.f32.mrf.mxu0
        %v498 = vadd.f32 0.0, %v497
        %v499 = vpop.f32.mrf.mxu0
        %v500 = vpop.f32.mrf.mxu0
        %v501 = vadd.f32 0.0, %v500
        %v502 = vpop.f32.mrf.mxu0
        %503 = vdwg.mxu0
        %v504 = vld [vmem:[#allocation5] sm:$0xf]
        %v505 = vld [vmem:[#allocation5 + $0x4] sm:$0xf]
        %v506 = vld [vmem:[#allocation5 + $0x8] sm:$0xf]
        %v507 = vld [vmem:[#allocation5 + $0xc] sm:$0xf]
        %v512 = vunpack.c.l.b16 %v504
        %v513 = vunpack.c.l.b16 %v505
        %v514 = vunpack.c.l.b16 %v506
        %v515 = vunpack.c.l.b16 %v507
        %v516 = vpack.c.b16 %v513, %v512
        %v517 = vpack.c.b16 %v515, %v514
        %v521 = vsel %vm459, %v442, 0
        %523 = vmatprep.subr.bf16.mxu0 0
        %524 = vmatpush1.bf16.msra.mxu0 0
        %525 = vmatprep.subr.bf16.mxu0 0
        %526 = vmatpush1.bf16.msra.mxu0 0
        %527 = vmatprep.subr.bf16.mxu0 0
        %528 = vmatpush1.bf16.msra.mxu0 0
        %529 = vmatprep.subr.bf16.mxu0 0
        %530 = vmatpush1.bf16.msra.mxu0 0
        %531 = vmatprep.subr.bf16.mxu0 0
        %532 = vmatpush1.bf16.msra.mxu0 0
        %533 = vmatprep.subr.bf16.mxu0 0
        %534 = vmatpush1.bf16.msra.mxu0 0
        %535 = vmatprep.subr.bf16.mxu0 0
        %536 = vmatpush1.bf16.msra.mxu0 %v517
        %537 = vmatprep.subr.bf16.mxu0 0
        %538 = vmatpush1.bf16.msra.mxu0 %v516
        %539 = vmatprep.subr.bf16.mxu0 0
        %540 = vmatpush2.bf16.msra.mxu0 0
        %541 = vmatprep.subr.bf16.mxu0 0
        %542 = vmatpush2.bf16.msra.mxu0 0
        %543 = vmatprep.subr.bf16.mxu0 0
        %544 = vmatpush2.bf16.msra.mxu0 0
        %545 = vmatprep.subr.bf16.mxu0 0
        %546 = vmatpush2.bf16.msra.mxu0 0
        %547 = vmatprep.subr.bf16.mxu0 0
        %548 = vmatpush2.bf16.msra.mxu0 0
        %549 = vmatprep.subr.bf16.mxu0 0
        %550 = vmatpush2.bf16.msra.mxu0 0
        %551 = vmatprep.subr.bf16.mxu0 0
        %552 = vmatpush2.bf16.msra.mxu0 0
        %553 = vmatprep.subr.bf16.mxu0 0
        %554 = vmatpush2.bf16.msra.mxu0 0
        %555 = vmatprep.mubr.bf16.mxu0 0
        %556 = vmatmul.mubr.bf16.gmra.mxu0 %v521
        %v557 = vpop.f32.mrf.mxu0
        %v558 = vadd.f32 0.0, %v557
        %v559 = vpop.f32.mrf.mxu0
        %v560 = vpop.f32.mrf.mxu0
        %v561 = vpop.f32.mrf.mxu0
        %562 = vdwg.mxu0
        %v563 = vld [vmem:[#allocation7] sm:$0xf]
        %v564 = vld [vmem:[#allocation7 + $0x4] sm:$0xf]
        %v565 = vld [vmem:[#allocation7 + $0x8] sm:$0xf]
        %v566 = vld [vmem:[#allocation7 + $0xc] sm:$0xf]
        %v571 = vunpack.c.l.b16 %v563
        %v572 = vunpack.c.l.b16 %v564
        %v573 = vunpack.c.l.b16 %v565
        %v574 = vunpack.c.l.b16 %v566
        %v575 = vpack.c.b16 %v572, %v571
        %v576 = vpack.c.b16 %v574, %v573
        %579 = vmatprep.subr.bf16.mxu0 0
        %580 = vmatpush1.bf16.msra.mxu0 0
        %581 = vmatprep.subr.bf16.mxu0 0
        %582 = vmatpush1.bf16.msra.mxu0 0
        %583 = vmatprep.subr.bf16.mxu0 0
        %584 = vmatpush1.bf16.msra.mxu0 0
        %585 = vmatprep.subr.bf16.mxu0 0
        %586 = vmatpush1.bf16.msra.mxu0 0
        %587 = vmatprep.subr.bf16.mxu0 0
        %588 = vmatpush1.bf16.msra.mxu0 0
        %589 = vmatprep.subr.bf16.mxu0 0
        %590 = vmatpush1.bf16.msra.mxu0 0
        %591 = vmatprep.subr.bf16.mxu0 0
        %592 = vmatpush1.bf16.msra.mxu0 %v576
        %593 = vmatprep.subr.bf16.mxu0 0
        %594 = vmatpush1.bf16.msra.mxu0 %v575
        %595 = vmatprep.subr.bf16.mxu0 0
        %596 = vmatpush2.bf16.msra.mxu0 0
        %597 = vmatprep.subr.bf16.mxu0 0
        %598 = vmatpush2.bf16.msra.mxu0 0
        %599 = vmatprep.subr.bf16.mxu0 0
        %600 = vmatpush2.bf16.msra.mxu0 0
        %601 = vmatprep.subr.bf16.mxu0 0
        %602 = vmatpush2.bf16.msra.mxu0 0
        %603 = vmatprep.subr.bf16.mxu0 0
        %604 = vmatpush2.bf16.msra.mxu0 0
        %605 = vmatprep.subr.bf16.mxu0 0
        %606 = vmatpush2.bf16.msra.mxu0 0
        %607 = vmatprep.subr.bf16.mxu0 0
        %608 = vmatpush2.bf16.msra.mxu0 0
        %609 = vmatprep.subr.bf16.mxu0 0
        %610 = vmatpush2.bf16.msra.mxu0 0
        %611 = vmatprep.mubr.bf16.mxu0 0
        %612 = vmatmul.mubr.bf16.gmra.mxu0 %v521
        %v613 = vpop.f32.mrf.mxu0
        %v614 = vadd.f32 0.0, %v613
        %v615 = vpop.f32.mrf.mxu0
        %v616 = vpop.f32.mrf.mxu0
        %v617 = vpop.f32.mrf.mxu0
        %618 = vdwg.mxu0
        %v619 = vmul.f32 %v498, 0.25
        %v620 = vmul.f32 %v501, 0.25
        %v621 = vpack.c.bf16 %v620, %v619
        %v622 = vpack.c.bf16 %v558, %v558
        %v623 = vpack.c.bf16 %v614, %v614
        %625 = vrot.lane.b32.xlu0 %v621, 120
        %v626 = vpop.permute.xlu0 %625
        %627 = vrot.lane.b32.xlu0 %v621, 112
        %v628 = vpop.permute.xlu0 %627
        %629 = vrot.lane.b32.xlu0 %v621, 104
        %v630 = vpop.permute.xlu0 %629
        %632 = vrot.lane.b32.xlu0 %v622, 120
        %v633 = vpop.permute.xlu0 %632
        %634 = vrot.lane.b32.xlu0 %v622, 112
        %v635 = vpop.permute.xlu0 %634
        %636 = vrot.lane.b32.xlu0 %v622, 104
        %v637 = vpop.permute.xlu0 %636
        %639 = vrot.lane.b32.xlu0 %v623, 120
        %v640 = vpop.permute.xlu0 %639
        %641 = vrot.lane.b32.xlu0 %v623, 112
        %v642 = vpop.permute.xlu0 %641
        %643 = vrot.lane.b32.xlu0 %v623, 104
        %v644 = vpop.permute.xlu0 %643
        %vm645 = vcmask 64512
        %v647 = vsel %vm645, %v621, 0
        %v650 = vsel %vm645, %v622, 0
        %652 = vmatprep.subr.bf16.mxu0 0
        %653 = vmatpush1.bf16.xpose.msra.mxu0 0
        %654 = vmatprep.subr.bf16.mxu0 0
        %655 = vmatpush1.bf16.xpose.msra.mxu0 0
        %656 = vmatprep.subr.bf16.mxu0 0
        %657 = vmatpush1.bf16.xpose.msra.mxu0 0
        %658 = vmatprep.subr.bf16.mxu0 0
        %659 = vmatpush1.bf16.xpose.msra.mxu0 0
        %660 = vmatprep.subr.bf16.mxu0 0
        %661 = vmatpush1.bf16.xpose.msra.mxu0 0
        %662 = vmatprep.subr.bf16.mxu0 0
        %663 = vmatpush1.bf16.xpose.msra.mxu0 0
        %664 = vmatprep.subr.bf16.mxu0 0
        %665 = vmatpush1.bf16.xpose.msra.mxu0 0
        %666 = vmatprep.subr.bf16.mxu0 0
        %667 = vmatpush1.bf16.xpose.msra.mxu0 %v650
        %668 = vmatprep.subr.bf16.mxu0 0
        %669 = vmatpush2.bf16.xpose.msra.mxu0 0
        %670 = vmatprep.subr.bf16.mxu0 0
        %671 = vmatpush2.bf16.xpose.msra.mxu0 0
        %672 = vmatprep.subr.bf16.mxu0 0
        %673 = vmatpush2.bf16.xpose.msra.mxu0 0
        %674 = vmatprep.subr.bf16.mxu0 0
        %675 = vmatpush2.bf16.xpose.msra.mxu0 0
        %676 = vmatprep.subr.bf16.mxu0 0
        %677 = vmatpush2.bf16.xpose.msra.mxu0 0
        %678 = vmatprep.subr.bf16.mxu0 0
        %679 = vmatpush2.bf16.xpose.msra.mxu0 0
        %680 = vmatprep.subr.bf16.mxu0 0
        %681 = vmatpush2.bf16.xpose.msra.mxu0 0
        %682 = vmatprep.subr.bf16.mxu0 0
        %683 = vmatpush2.bf16.xpose.msra.mxu0 0
        %684 = vmatprep.mubr.bf16.mxu0 0
        %685 = vmatmul.mubr.bf16.gmra.mxu0 %v647
        %v686 = vpop.f32.mrf.mxu0
        %v687 = vadd.f32 0.0, %v686
        %v688 = vpop.f32.mrf.mxu0
        %v689 = vpop.f32.mrf.mxu0
        %v690 = vadd.f32 0.0, %v689
        %v691 = vpop.f32.mrf.mxu0
        %692 = vdwg.mxu0
        %v694 = vsel %vm645, %v626, 0
        %v697 = vsel %vm645, %v633, 0
        %699 = vmatprep.subr.bf16.mxu0 0
        %700 = vmatpush1.bf16.xpose.msra.mxu0 0
        %701 = vmatprep.subr.bf16.mxu0 0
        %702 = vmatpush1.bf16.xpose.msra.mxu0 0
        %703 = vmatprep.subr.bf16.mxu0 0
        %704 = vmatpush1.bf16.xpose.msra.mxu0 0
        %705 = vmatprep.subr.bf16.mxu0 0
        %706 = vmatpush1.bf16.xpose.msra.mxu0 0
        %707 = vmatprep.subr.bf16.mxu0 0
        %708 = vmatpush1.bf16.xpose.msra.mxu0 0
        %709 = vmatprep.subr.bf16.mxu0 0
        %710 = vmatpush1.bf16.xpose.msra.mxu0 0
        %711 = vmatprep.subr.bf16.mxu0 0
        %712 = vmatpush1.bf16.xpose.msra.mxu0 0
        %713 = vmatprep.subr.bf16.mxu0 0
        %714 = vmatpush1.bf16.xpose.msra.mxu0 %v697
        %715 = vmatprep.subr.bf16.mxu0 0
        %716 = vmatpush2.bf16.xpose.msra.mxu0 0
        %717 = vmatprep.subr.bf16.mxu0 0
        %718 = vmatpush2.bf16.xpose.msra.mxu0 0
        %719 = vmatprep.subr.bf16.mxu0 0
        %720 = vmatpush2.bf16.xpose.msra.mxu0 0
        %721 = vmatprep.subr.bf16.mxu0 0
        %722 = vmatpush2.bf16.xpose.msra.mxu0 0
        %723 = vmatprep.subr.bf16.mxu0 0
        %724 = vmatpush2.bf16.xpose.msra.mxu0 0
        %725 = vmatprep.subr.bf16.mxu0 0
        %726 = vmatpush2.bf16.xpose.msra.mxu0 0
        %727 = vmatprep.subr.bf16.mxu0 0
        %728 = vmatpush2.bf16.xpose.msra.mxu0 0
        %729 = vmatprep.subr.bf16.mxu0 0
        %730 = vmatpush2.bf16.xpose.msra.mxu0 0
        %731 = vmatprep.mubr.bf16.mxu0 0
        %732 = vmatmul.mubr.bf16.gmra.mxu0 %v694
        %v733 = vpop.f32.mrf.mxu0
        %v734 = vadd.f32 0.0, %v733
        %v735 = vpop.f32.mrf.mxu0
        %v736 = vpop.f32.mrf.mxu0
        %v737 = vadd.f32 0.0, %v736
        %v738 = vpop.f32.mrf.mxu0
        %739 = vdwg.mxu0
        %v741 = vsel %vm645, %v628, 0
        %v744 = vsel %vm645, %v635, 0
        %746 = vmatprep.subr.bf16.mxu0 0
        %747 = vmatpush1.bf16.xpose.msra.mxu0 0
        %748 = vmatprep.subr.bf16.mxu0 0
        %749 = vmatpush1.bf16.xpose.msra.mxu0 0
        %750 = vmatprep.subr.bf16.mxu0 0
        %751 = vmatpush1.bf16.xpose.msra.mxu0 0
        %752 = vmatprep.subr.bf16.mxu0 0
        %753 = vmatpush1.bf16.xpose.msra.mxu0 0
        %754 = vmatprep.subr.bf16.mxu0 0
        %755 = vmatpush1.bf16.xpose.msra.mxu0 0
        %756 = vmatprep.subr.bf16.mxu0 0
        %757 = vmatpush1.bf16.xpose.msra.mxu0 0
        %758 = vmatprep.subr.bf16.mxu0 0
        %759 = vmatpush1.bf16.xpose.msra.mxu0 0
        %760 = vmatprep.subr.bf16.mxu0 0
        %761 = vmatpush1.bf16.xpose.msra.mxu0 %v744
        %762 = vmatprep.subr.bf16.mxu0 0
        %763 = vmatpush2.bf16.xpose.msra.mxu0 0
        %764 = vmatprep.subr.bf16.mxu0 0
        %765 = vmatpush2.bf16.xpose.msra.mxu0 0
        %766 = vmatprep.subr.bf16.mxu0 0
        %767 = vmatpush2.bf16.xpose.msra.mxu0 0
        %768 = vmatprep.subr.bf16.mxu0 0
        %769 = vmatpush2.bf16.xpose.msra.mxu0 0
        %770 = vmatprep.subr.bf16.mxu0 0
        %771 = vmatpush2.bf16.xpose.msra.mxu0 0
        %772 = vmatprep.subr.bf16.mxu0 0
        %773 = vmatpush2.bf16.xpose.msra.mxu0 0
        %774 = vmatprep.subr.bf16.mxu0 0
        %775 = vmatpush2.bf16.xpose.msra.mxu0 0
        %776 = vmatprep.subr.bf16.mxu0 0
        %777 = vmatpush2.bf16.xpose.msra.mxu0 0
        %778 = vmatprep.mubr.bf16.mxu0 0
        %779 = vmatmul.mubr.bf16.gmra.mxu0 %v741
        %v780 = vpop.f32.mrf.mxu0
        %v781 = vadd.f32 0.0, %v780
        %v782 = vpop.f32.mrf.mxu0
        %v783 = vpop.f32.mrf.mxu0
        %v784 = vadd.f32 0.0, %v783
        %v785 = vpop.f32.mrf.mxu0
        %786 = vdwg.mxu0
        %v788 = vsel %vm645, %v630, 0
        %v791 = vsel %vm645, %v637, 0
        %793 = vmatprep.subr.bf16.mxu0 0
        %794 = vmatpush1.bf16.xpose.msra.mxu0 0
        %795 = vmatprep.subr.bf16.mxu0 0
        %796 = vmatpush1.bf16.xpose.msra.mxu0 0
        %797 = vmatprep.subr.bf16.mxu0 0
        %798 = vmatpush1.bf16.xpose.msra.mxu0 0
        %799 = vmatprep.subr.bf16.mxu0 0
        %800 = vmatpush1.bf16.xpose.msra.mxu0 0
        %801 = vmatprep.subr.bf16.mxu0 0
        %802 = vmatpush1.bf16.xpose.msra.mxu0 0
        %803 = vmatprep.subr.bf16.mxu0 0
        %804 = vmatpush1.bf16.xpose.msra.mxu0 0
        %805 = vmatprep.subr.bf16.mxu0 0
        %806 = vmatpush1.bf16.xpose.msra.mxu0 0
        %807 = vmatprep.subr.bf16.mxu0 0
        %808 = vmatpush1.bf16.xpose.msra.mxu0 %v791
        %809 = vmatprep.subr.bf16.mxu0 0
        %810 = vmatpush2.bf16.xpose.msra.mxu0 0
        %811 = vmatprep.subr.bf16.mxu0 0
        %812 = vmatpush2.bf16.xpose.msra.mxu0 0
        %813 = vmatprep.subr.bf16.mxu0 0
        %814 = vmatpush2.bf16.xpose.msra.mxu0 0
        %815 = vmatprep.subr.bf16.mxu0 0
        %816 = vmatpush2.bf16.xpose.msra.mxu0 0
        %817 = vmatprep.subr.bf16.mxu0 0
        %818 = vmatpush2.bf16.xpose.msra.mxu0 0
        %819 = vmatprep.subr.bf16.mxu0 0
        %820 = vmatpush2.bf16.xpose.msra.mxu0 0
        %821 = vmatprep.subr.bf16.mxu0 0
        %822 = vmatpush2.bf16.xpose.msra.mxu0 0
        %823 = vmatprep.subr.bf16.mxu0 0
        %824 = vmatpush2.bf16.xpose.msra.mxu0 0
        %825 = vmatprep.mubr.bf16.mxu0 0
        %826 = vmatmul.mubr.bf16.gmra.mxu0 %v788
        %v827 = vpop.f32.mrf.mxu0
        %v828 = vadd.f32 0.0, %v827
        %v829 = vpop.f32.mrf.mxu0
        %v830 = vpop.f32.mrf.mxu0
        %v831 = vadd.f32 0.0, %v830
        %v832 = vpop.f32.mrf.mxu0
        %833 = vdwg.mxu0
        %v834 = vld [vmem:[%s431] sm:$0x3]
        %v835 = vld [vmem:[%s431 + $0x2] sm:$0x3]
        %v836 = vunpack.c.0.s8 %v834
        %v837 = vunpack.c.0.s8 %v835
        %v838 = vcvt.s32.f32 %v836
        %v839 = vcvt.s32.f32 %v837
        %v840 = vmul.f32 %v838, -1e+30
        %v841 = vmul.f32 %v839, -1e+30
        %v842 = vadd.f32 %v687, %v840
        %v843 = vadd.f32 %v690, %v841
        %v844 = vadd.f32 %v734, %v840
        %v845 = vadd.f32 %v737, %v841
        %v846 = vadd.f32 %v781, %v840
        %v847 = vadd.f32 %v784, %v841
        %v848 = vadd.f32 %v828, %v840
        %v849 = vadd.f32 %v831, %v841
        %v850 = vsel %vm645, %v842, -inf
        %851 = vmax.xlane.f32.xlu0 %v850
        %v852 = vpop.xlane.xlu0 %851
        %v853 = vsel %vm645, %v843, -inf
        %854 = vmax.xlane.f32.xlu0 %v853
        %v855 = vpop.xlane.xlu0 %854
        %v856 = vsel %vm645, %v844, -inf
        %857 = vmax.xlane.f32.xlu0 %v856
        %v858 = vpop.xlane.xlu0 %857
        %v859 = vsel %vm645, %v845, -inf
        %860 = vmax.xlane.f32.xlu0 %v859
        %v861 = vpop.xlane.xlu0 %860
        %v862 = vsel %vm645, %v846, -inf
        %863 = vmax.xlane.f32.xlu0 %v862
        %v864 = vpop.xlane.xlu0 %863
        %v865 = vsel %vm645, %v847, -inf
        %866 = vmax.xlane.f32.xlu0 %v865
        %v867 = vpop.xlane.xlu0 %866
        %v868 = vsel %vm645, %v848, -inf
        %869 = vmax.xlane.f32.xlu0 %v868
        %v870 = vpop.xlane.xlu0 %869
        %v871 = vsel %vm645, %v849, -inf
        %872 = vmax.xlane.f32.xlu0 %v871
        %v873 = vpop.xlane.xlu0 %872
        %v874 = vsub.f32 %v842, %v852
        %v875 = vsub.f32 %v843, %v855
        %v876 = vsub.f32 %v844, %v858
        %v877 = vsub.f32 %v845, %v861
        %v878 = vsub.f32 %v846, %v864
        %v879 = vsub.f32 %v847, %v867
        %v880 = vsub.f32 %v848, %v870
        %v881 = vsub.f32 %v849, %v873
        %v882 = vmul.f32 %v874, 1.442695
        %v883 = vpow.pop %v882
        %v884 = vmul.f32 %v875, 1.442695
        %v885 = vpow.pop %v884
        %v886 = vmul.f32 %v876, 1.442695
        %v887 = vpow.pop %v886
        %v888 = vmul.f32 %v877, 1.442695
        %v889 = vpow.pop %v888
        %v890 = vmul.f32 %v878, 1.442695
        %v891 = vpow.pop %v890
        %v892 = vmul.f32 %v879, 1.442695
        %v893 = vpow.pop %v892
        %v894 = vmul.f32 %v880, 1.442695
        %v895 = vpow.pop %v894
        %v896 = vmul.f32 %v881, 1.442695
        %v897 = vpow.pop %v896
        %v898 = vsel %vm645, %v883, 0.0
        %899 = vadd.xlane.f32.xlu0 %v898
        %v900 = vpop.xlane.xlu0 %899
        %v901 = vsel %vm645, %v885, 0.0
        %902 = vadd.xlane.f32.xlu0 %v901
        %v903 = vpop.xlane.xlu0 %902
        %v904 = vsel %vm645, %v887, 0.0
        %905 = vadd.xlane.f32.xlu0 %v904
        %v906 = vpop.xlane.xlu0 %905
        %v907 = vsel %vm645, %v889, 0.0
        %908 = vadd.xlane.f32.xlu0 %v907
        %v909 = vpop.xlane.xlu0 %908
        %v910 = vsel %vm645, %v891, 0.0
        %911 = vadd.xlane.f32.xlu0 %v910
        %v912 = vpop.xlane.xlu0 %911
        %v913 = vsel %vm645, %v893, 0.0
        %914 = vadd.xlane.f32.xlu0 %v913
        %v915 = vpop.xlane.xlu0 %914
        %v916 = vsel %vm645, %v895, 0.0
        %917 = vadd.xlane.f32.xlu0 %v916
        %v918 = vpop.xlane.xlu0 %917
        %v919 = vsel %vm645, %v897, 0.0
        %920 = vadd.xlane.f32.xlu0 %v919
        %v921 = vpop.xlane.xlu0 %920
        %v922 = vrcp.pop %v900
        %v923 = vmul.f32 %v883, %v922
        %v924 = vrcp.pop %v903
        %v925 = vmul.f32 %v885, %v924
        %v926 = vrcp.pop %v906
        %v927 = vmul.f32 %v887, %v926
        %v928 = vrcp.pop %v909
        %v929 = vmul.f32 %v889, %v928
        %v930 = vrcp.pop %v912
        %v931 = vmul.f32 %v891, %v930
        %v932 = vrcp.pop %v915
        %v933 = vmul.f32 %v893, %v932
        %v934 = vrcp.pop %v918
        %v935 = vmul.f32 %v895, %v934
        %v936 = vrcp.pop %v921
        %v937 = vmul.f32 %v897, %v936
        %v938 = vpack.c.bf16 %v925, %v923
        %v939 = vpack.c.bf16 %v929, %v927
        %v940 = vpack.c.bf16 %v933, %v931
        %v941 = vpack.c.bf16 %v937, %v935
        %v943 = vsel %vm645, %v938, 0
        %vm945 = vcmask 1043456
        %v947 = vsel %vm945, %v623, 0
        %949 = vmatprep.subr.bf16.mxu0 0
        %950 = vmatpush1.bf16.msra.mxu0 0
        %951 = vmatprep.subr.bf16.mxu0 0
        %952 = vmatpush1.bf16.msra.mxu0 0
        %953 = vmatprep.subr.bf16.mxu0 0
        %954 = vmatpush1.bf16.msra.mxu0 0
        %955 = vmatprep.subr.bf16.mxu0 0
        %956 = vmatpush1.bf16.msra.mxu0 0
        %957 = vmatprep.subr.bf16.mxu0 0
        %958 = vmatpush1.bf16.msra.mxu0 0
        %959 = vmatprep.subr.bf16.mxu0 0
        %960 = vmatpush1.bf16.msra.mxu0 0
        %961 = vmatprep.subr.bf16.mxu0 0
        %962 = vmatpush1.bf16.msra.mxu0 0
        %963 = vmatprep.subr.bf16.mxu0 0
        %964 = vmatpush1.bf16.msra.mxu0 %v947
        %965 = vmatprep.subr.bf16.mxu0 0
        %966 = vmatpush2.bf16.msra.mxu0 0
        %967 = vmatprep.subr.bf16.mxu0 0
        %968 = vmatpush2.bf16.msra.mxu0 0
        %969 = vmatprep.subr.bf16.mxu0 0
        %970 = vmatpush2.bf16.msra.mxu0 0
        %971 = vmatprep.subr.bf16.mxu0 0
        %972 = vmatpush2.bf16.msra.mxu0 0
        %973 = vmatprep.subr.bf16.mxu0 0
        %974 = vmatpush2.bf16.msra.mxu0 0
        %975 = vmatprep.subr.bf16.mxu0 0
        %976 = vmatpush2.bf16.msra.mxu0 0
        %977 = vmatprep.subr.bf16.mxu0 0
        %978 = vmatpush2.bf16.msra.mxu0 0
        %979 = vmatprep.subr.bf16.mxu0 0
        %980 = vmatpush2.bf16.msra.mxu0 0
        %981 = vmatprep.mubr.bf16.mxu0 0
        %982 = vmatmul.mubr.bf16.gmra.mxu0 %v943
        %v983 = vpop.f32.mrf.mxu0
        %v984 = vadd.f32 0.0, %v983
        %v985 = vpop.f32.mrf.mxu0
        %v986 = vpop.f32.mrf.mxu0
        %v987 = vadd.f32 0.0, %v986
        %v988 = vpop.f32.mrf.mxu0
        %989 = vdwg.mxu0
        %v991 = vsel %vm645, %v939, 0
        %v994 = vsel %vm945, %v640, 0
        %996 = vmatprep.subr.bf16.mxu0 0
        %997 = vmatpush1.bf16.msra.mxu0 0
        %998 = vmatprep.subr.bf16.mxu0 0
        %999 = vmatpush1.bf16.msra.mxu0 0
        %1000 = vmatprep.subr.bf16.mxu0 0
        %1001 = vmatpush1.bf16.msra.mxu0 0
        %1002 = vmatprep.subr.bf16.mxu0 0
        %1003 = vmatpush1.bf16.msra.mxu0 0
        %1004 = vmatprep.subr.bf16.mxu0 0
        %1005 = vmatpush1.bf16.msra.mxu0 0
        %1006 = vmatprep.subr.bf16.mxu0 0
        %1007 = vmatpush1.bf16.msra.mxu0 0
        %1008 = vmatprep.subr.bf16.mxu0 0
        %1009 = vmatpush1.bf16.msra.mxu0 0
        %1010 = vmatprep.subr.bf16.mxu0 0
        %1011 = vmatpush1.bf16.msra.mxu0 %v994
        %1012 = vmatprep.subr.bf16.mxu0 0
        %1013 = vmatpush2.bf16.msra.mxu0 0
        %1014 = vmatprep.subr.bf16.mxu0 0
        %1015 = vmatpush2.bf16.msra.mxu0 0
        %1016 = vmatprep.subr.bf16.mxu0 0
        %1017 = vmatpush2.bf16.msra.mxu0 0
        %1018 = vmatprep.subr.bf16.mxu0 0
        %1019 = vmatpush2.bf16.msra.mxu0 0
        %1020 = vmatprep.subr.bf16.mxu0 0
        %1021 = vmatpush2.bf16.msra.mxu0 0
        %1022 = vmatprep.subr.bf16.mxu0 0
        %1023 = vmatpush2.bf16.msra.mxu0 0
        %1024 = vmatprep.subr.bf16.mxu0 0
        %1025 = vmatpush2.bf16.msra.mxu0 0
        %1026 = vmatprep.subr.bf16.mxu0 0
        %1027 = vmatpush2.bf16.msra.mxu0 0
        %1028 = vmatprep.mubr.bf16.mxu0 0
        %1029 = vmatmul.mubr.bf16.gmra.mxu0 %v991
        %v1030 = vpop.f32.mrf.mxu0
        %v1031 = vadd.f32 0.0, %v1030
        %v1032 = vpop.f32.mrf.mxu0
        %v1033 = vpop.f32.mrf.mxu0
        %v1034 = vadd.f32 0.0, %v1033
        %v1035 = vpop.f32.mrf.mxu0
        %1036 = vdwg.mxu0
        %v1038 = vsel %vm645, %v940, 0
        %v1041 = vsel %vm945, %v642, 0
        %1043 = vmatprep.subr.bf16.mxu0 0
        %1044 = vmatpush1.bf16.msra.mxu0 0
        %1045 = vmatprep.subr.bf16.mxu0 0
        %1046 = vmatpush1.bf16.msra.mxu0 0
        %1047 = vmatprep.subr.bf16.mxu0 0
        %1048 = vmatpush1.bf16.msra.mxu0 0
        %1049 = vmatprep.subr.bf16.mxu0 0
        %1050 = vmatpush1.bf16.msra.mxu0 0
        %1051 = vmatprep.subr.bf16.mxu0 0
        %1052 = vmatpush1.bf16.msra.mxu0 0
        %1053 = vmatprep.subr.bf16.mxu0 0
        %1054 = vmatpush1.bf16.msra.mxu0 0
        %1055 = vmatprep.subr.bf16.mxu0 0
        %1056 = vmatpush1.bf16.msra.mxu0 0
        %1057 = vmatprep.subr.bf16.mxu0 0
        %1058 = vmatpush1.bf16.msra.mxu0 %v1041
        %1059 = vmatprep.subr.bf16.mxu0 0
        %1060 = vmatpush2.bf16.msra.mxu0 0
        %1061 = vmatprep.subr.bf16.mxu0 0
        %1062 = vmatpush2.bf16.msra.mxu0 0
        %1063 = vmatprep.subr.bf16.mxu0 0
        %1064 = vmatpush2.bf16.msra.mxu0 0
        %1065 = vmatprep.subr.bf16.mxu0 0
        %1066 = vmatpush2.bf16.msra.mxu0 0
        %1067 = vmatprep.subr.bf16.mxu0 0
        %1068 = vmatpush2.bf16.msra.mxu0 0
        %1069 = vmatprep.subr.bf16.mxu0 0
        %1070 = vmatpush2.bf16.msra.mxu0 0
        %1071 = vmatprep.subr.bf16.mxu0 0
        %1072 = vmatpush2.bf16.msra.mxu0 0
        %1073 = vmatprep.subr.bf16.mxu0 0
        %1074 = vmatpush2.bf16.msra.mxu0 0
        %1075 = vmatprep.mubr.bf16.mxu0 0
        %1076 = vmatmul.mubr.bf16.gmra.mxu0 %v1038
        %v1077 = vpop.f32.mrf.mxu0
        %v1078 = vadd.f32 0.0, %v1077
        %v1079 = vpop.f32.mrf.mxu0
        %v1080 = vpop.f32.mrf.mxu0
        %v1081 = vadd.f32 0.0, %v1080
        %v1082 = vpop.f32.mrf.mxu0
        %1083 = vdwg.mxu0
        %v1085 = vsel %vm645, %v941, 0
        %v1088 = vsel %vm945, %v644, 0
        %1090 = vmatprep.subr.bf16.mxu0 0
        %1091 = vmatpush1.bf16.msra.mxu0 0
        %1092 = vmatprep.subr.bf16.mxu0 0
        %1093 = vmatpush1.bf16.msra.mxu0 0
        %1094 = vmatprep.subr.bf16.mxu0 0
        %1095 = vmatpush1.bf16.msra.mxu0 0
        %1096 = vmatprep.subr.bf16.mxu0 0
        %1097 = vmatpush1.bf16.msra.mxu0 0
        %1098 = vmatprep.subr.bf16.mxu0 0
        %1099 = vmatpush1.bf16.msra.mxu0 0
        %1100 = vmatprep.subr.bf16.mxu0 0
        %1101 = vmatpush1.bf16.msra.mxu0 0
        %1102 = vmatprep.subr.bf16.mxu0 0
        %1103 = vmatpush1.bf16.msra.mxu0 0
        %1104 = vmatprep.subr.bf16.mxu0 0
        %1105 = vmatpush1.bf16.msra.mxu0 %v1088
        %1106 = vmatprep.subr.bf16.mxu0 0
        %1107 = vmatpush2.bf16.msra.mxu0 0
        %1108 = vmatprep.subr.bf16.mxu0 0
        %1109 = vmatpush2.bf16.msra.mxu0 0
        %1110 = vmatprep.subr.bf16.mxu0 0
        %1111 = vmatpush2.bf16.msra.mxu0 0
        %1112 = vmatprep.subr.bf16.mxu0 0
        %1113 = vmatpush2.bf16.msra.mxu0 0
        %1114 = vmatprep.subr.bf16.mxu0 0
        %1115 = vmatpush2.bf16.msra.mxu0 0
        %1116 = vmatprep.subr.bf16.mxu0 0
        %1117 = vmatpush2.bf16.msra.mxu0 0
        %1118 = vmatprep.subr.bf16.mxu0 0
        %1119 = vmatpush2.bf16.msra.mxu0 0
        %1120 = vmatprep.subr.bf16.mxu0 0
        %1121 = vmatpush2.bf16.msra.mxu0 0
        %1122 = vmatprep.mubr.bf16.mxu0 0
        %1123 = vmatmul.mubr.bf16.gmra.mxu0 %v1085
        %v1124 = vpop.f32.mrf.mxu0
        %v1125 = vadd.f32 0.0, %v1124
        %v1126 = vpop.f32.mrf.mxu0
        %v1127 = vpop.f32.mrf.mxu0
        %v1128 = vadd.f32 0.0, %v1127
        %v1129 = vpop.f32.mrf.mxu0
        %1130 = vdwg.mxu0
        %1133 = vrot.lane.b32.xlu0 %v1031, 8
        %v1134 = vpop.permute.xlu0 %1133
        %1135 = vrot.lane.b32.xlu0 %v1034, 8
        %v1136 = vpop.permute.xlu0 %1135
        %1141 = vrot.lane.b32.xlu0 %v1078, 16
        %v1142 = vpop.permute.xlu0 %1141
        %1143 = vrot.lane.b32.xlu0 %v1081, 16
        %v1144 = vpop.permute.xlu0 %1143
        %1149 = vrot.lane.b32.xlu0 %v1125, 24
        %v1150 = vpop.permute.xlu0 %1149
        %1151 = vrot.lane.b32.xlu0 %v1128, 24
        %v1152 = vpop.permute.xlu0 %1151
        %v1155 = vsel %vm645, %v984, %v1134
        %v1156 = vsel %vm645, %v987, %v1136
        %vm1157 = vcmask 130048
        %v1158 = vsel %vm1157, %v1155, %v1142
        %v1159 = vsel %vm1157, %v1156, %v1144
        %vm1160 = vcmask 195584
        %v1161 = vsel %vm1160, %v1158, %v1150
        %v1162 = vsel %vm1160, %v1159, %v1152
        %v1163 = vadd.f32 %v1161, %v438
        %v1164 = vadd.f32 %v1162, %v439
        %v1165 = vsel %vm459, %v1163, 0.0
        %1166 = vadd.xlane.f32.xlu0 %v1165
        %v1167 = vpop.xlane.xlu0 %1166
        %v1168 = vsel %vm459, %v1164, 0.0
        %1169 = vadd.xlane.f32.xlu0 %v1168
        %v1170 = vpop.xlane.xlu0 %1169
        %v1171 = vrcp.pop 32.0
        %v1172 = vmul.f32 %v1167, %v1171
        %v1173 = vmul.f32 %v1170, %v1171
        %v1174 = vsub.f32 %v1163, %v1172
        %v1175 = vsub.f32 %v1164, %v1173
        %v1176 = vmul.f32 %v1174, %v1174
        %v1177 = vmul.f32 %v1175, %v1175
        %v1178 = vsel %vm459, %v1176, 0.0
        %1179 = vadd.xlane.f32.xlu0 %v1178
        %v1180 = vpop.xlane.xlu0 %1179
        %v1181 = vsel %vm459, %v1177, 0.0
        %1182 = vadd.xlane.f32.xlu0 %v1181
        %v1183 = vpop.xlane.xlu0 %1182
        %v1184 = vmul.f32 %v1180, %v1171
        %v1185 = vmul.f32 %v1183, %v1171
        %v1186 = vadd.f32 %v1184, 1e-05
        %v1187 = vadd.f32 %v1185, 1e-05
        %v1188 = vrsqrt.pop %v1186
        %v1189 = vrsqrt.pop %v1187
        %v1190 = vmul.f32 %v1174, %v1188
        %v1191 = vmul.f32 %v1175, %v1189
        %v1192 = vld [vmem:[%s7] sm:$0x1]
        %v1194 = vlaneseq
        %v1195 = vshrl.u32 %v1194, 7
        %v1196 = vsub.s32 0, %v1195
        %v1197 = vrot.slane %v1192, %v1196
        %v1199 = vmul.f32 %v1190, %v1197
        %v1200 = vmul.f32 %v1191, %v1197
        %v1201 = vld [vmem:[%s8] sm:$0x1]
        %v1203 = vlaneseq
        %v1204 = vshrl.u32 %v1203, 7
        %v1205 = vsub.s32 0, %v1204
        %v1206 = vrot.slane %v1201, %v1205
        %v1208 = vadd.f32 %v1199, %v1206
        %v1209 = vadd.f32 %v1200, %v1206
        %v1210 = vld [vmem:[%s436] sm:$0xff]
        %v1211 = vld [vmem:[%s436 + $0x8] sm:$0xff]
        %1213 = vset.pattern.permute.xlu0 0
        %1214 = vperm.xlu0 %1213, %v1210
        %v1215 = vpop.permute.xlu0 %1214
        %1218 = vset.pattern.permute.xlu0 0
        %1219 = vperm.xlu0 %1218, %v1211
        %v1220 = vpop.permute.xlu0 %1219
        %v1222 = vmul.f32 %v1208, %v1215
        %v1223 = vmul.f32 %v1209, %v1220
        %1224 = vst.msk [vmem:[%s421] sm:$0xff] %vm459, %v1222
        %1225 = vst.msk [vmem:[%s421 + $0x8] sm:$0xff] %vm459, %v1223
        %s1226 = sand.u32 %s244, 1
        %s1227 = scalar_lea.sflag [#allocation4], %s1226
        %s1228 = sand.u32 %s244, 1
        %s1229 = smul.addr %s1228, 16
        %s1230 = scalar_lea.vmem [#allocation8], %s1229
        // Predicated region
        $region69: #{tpu_custom_call.1} parent=55 // pred_check
          %p1231 = pneg %p254
        $region70: #{tpu_custom_call.1} parent=55 // pred_check_branch
          %1233 = sbr.rel (%p1231) target = $region72
        $region71: #{tpu_custom_call.1} parent=55 // pred_region
          %s1235 = ssub.s32 256, 256
          %1236 = vsyncadd %s1227, %s1235
          %s1237 = smul.addr %s27, 2
          %s1238 = smul.addr %s1237, 128
          %s1239 = scalar_lea.hbm %s9, %s1238
          %s1240 = sshll.u32 %s1230, 4
          %s1241 = int_to_ptr.vmem [resolvable:$true] %s1240
          %1246 = dma.vmem_to_hbm [thread:$0]  %s1241, 256, %s1239, %s1227, 128, 128, 8
        $region72: #{tpu_custom_call.1} parent=55 // pred_fallthru
          _
      $region56: #{tpu_custom_call.1} parent=5 // pred_fallthru
        _
      %p1247 = scmp.le.s32.totalorder 2, %s22
      // Predicated region
      $region73: #{tpu_custom_call.1} parent=5 // pred_check
        %p1248 = pneg %p1247
      $region74: #{tpu_custom_call.1} parent=5 // pred_check_branch
        %1250 = sbr.rel (%p1248) target = $region76
      $region75: #{tpu_custom_call.1} parent=5 // pred_region
        %s1251 = ssub.s32 %s22, 2
        // Predicated region
        $region77: #{tpu_custom_call.1} parent=75 // pred_check
          %p1252 = pneg %p260
        $region78: #{tpu_custom_call.1} parent=75 // pred_check_branch
          %1254 = sbr.rel (%p1252) target = $region80
        $region79: #{tpu_custom_call.1} parent=75 // pred_region
          %s1255 = sand.u32 %s245, 1
          %s1256 = scalar_lea.sflag [#allocation4], %s1255
          %s1257 = sand.u32 %s245, 1
          %s1258 = smul.addr %s1257, 16
          %s1259 = scalar_lea.vmem [#allocation8], %s1258
          %1260 = dma.done %s1256, 256
        $region80: #{tpu_custom_call.1} parent=75 // pred_fallthru
          _
      $region76: #{tpu_custom_call.1} parent=5 // pred_fallthru
        _
    $region6: #{tpu_custom_call.1} parent=1 // loop_footer
      %s26 = sadd.s32 1, %s22
    $region7: #{tpu_custom_call.1} parent=1 // loop_footer_branch
      %21 = sbr.rel target = $region3
    $region8: #{tpu_custom_call.1} parent=1 // loop_exit
      _
    %1261 = vsyncpa [#allocation3], 1
    %s1262 = scalar_lea.sflag [#allocation3], 1
    %1263 = vsyncpa %s1262, 1
    %1264 = vsyncpa [#allocation6], 1
    %1265 = vsyncpa [#allocation4], 1
    %s1266 = scalar_lea.sflag [#allocation4], 1
    %1267 = vsyncpa %s1266, 1

</llo_original>
